<compile_context>
chip_gen: v6e
topology: v6e:2x2x1
jax: 0.10.0
libtpu: 0.0.40
codegen_flags: <defaults>
</compile_context>

<pallas_src>
import jax
import jax.numpy as jnp
from jax import lax
from jax.experimental import pallas as pl
from jax.experimental.pallas import tpu as pltpu  # noqa: F401  (TPU backend assumed)


# ----------------------------- in-kernel helpers -----------------------------

def _rank_topk_pool(x, wp_row, bp, k):
    """Loop-free top-k node pooling (torch.topk semantics: descending, first
    index wins ties).

    x:      (n, d) f32 features (down-GCN output)
    wp_row: (1, d) f32 pool projection weight (as a row)
    bp:     (1, 1) f32 pool projection bias
    Returns:
      xp: (k, d)  == x[idx, :] * sigmoid(score[idx]/100)   (rank order)
      p : (n, k)  one-hot scatter matrix; `p @ y` un-pools y back to n rows.
    """
    n, d = x.shape
    f32 = jnp.float32

    # (n, n) raw-score matrix via one MXU matmul: every row holds the pool
    # scores of all n nodes (column j = score of node j).  Columns are bitwise
    # identical across rows, so the diagonal gives each node's own score in the
    # sublane orientation with no transpose needed.
    wp_b = jnp.broadcast_to(wp_row, (n, d))
    raw = lax.dot_general(wp_b, x, (((1,), (1,)), ((), ())),
                          preferred_element_type=f32) + bp          # (n, n)
    s_nn = jax.nn.sigmoid(raw / f32(100.0))                          # (n, n)

    row_i = lax.broadcasted_iota(jnp.int32, (n, n), 0)
    col_j = lax.broadcasted_iota(jnp.int32, (n, n), 1)
    s_col = jnp.sum(jnp.where(row_i == col_j, s_nn, 0.0),
                    axis=1, keepdims=True)                           # (n, 1) diag
    s_j = s_nn      # score of node j (varies along lanes)
    s_i = s_col     # score of node i (varies along sublanes)

    # Strict total order: "a beats b" iff s_a > s_b, or s_a == s_b and a < b.
    # (Exact float equality is fine here: both sides come from the same matrix.)
    j_beats_i = (s_j > s_i) | ((s_j == s_i) & (col_j < row_i))
    i_beats_j = (s_i > s_j) | ((s_i == s_j) & (row_i < col_j))
    rank_i = jnp.sum(j_beats_i.astype(f32), axis=1,
                     keepdims=True).astype(jnp.int32)                # (n, 1)
    rank_j = jnp.sum(i_beats_j.astype(f32), axis=0,
                     keepdims=True).astype(jnp.int32)                # (1, n)

    # One-hot selection matrices straight from the ranks (no loop, no argmax).
    sel = (jnp.broadcast_to(rank_j, (k, n)) ==
           lax.broadcasted_iota(jnp.int32, (k, n), 0)).astype(f32)   # (k, n)
    p = (rank_i ==
         lax.broadcasted_iota(jnp.int32, (n, k), 1)).astype(f32)     # (n, k)

    # Gather + scale fused into one MXU matmul (scale-then-gather == reference
    # gather-then-scale since sel is one-hot).
    xp = jnp.dot(sel, x * s_col, preferred_element_type=f32)          # (k, d)
    return xp, p


def _build_graph_unet_kernel(dim, out_pad, l_n, keep_sizes):
    """Fused whole-forward kernel for a static level configuration."""

    def kernel(x_ref, w_start_ref, w_stack_ref, w_end_ref, bias_ref,
               o_end_ref, o_start_ref):
        f32 = jnp.float32

        def bias_row(r, width):
            return bias_ref[r:r + 1, 0:width]

        # Packed bias-row layout (see wrapper):
        #   b_start | b_down[l_n] | wp[l_n] | bp[l_n] (col 0) | b_bot |
        #   b_up[l_n] | b_end
        R_BSTART = 0
        R_BDOWN = 1
        R_WP = 1 + l_n
        R_BP = 1 + 2 * l_n
        R_BBOT = 1 + 3 * l_n
        R_BUP = 2 + 3 * l_n
        R_BEND = 2 + 4 * l_n

        # NOTE: at large N (>= ~1k) cast the dot operands to bf16 (keeping
        # preferred_element_type=f32) for the 256-wide MXUs on v6e/v7x; at the
        # demo size this is a no-op so everything stays f32.

        # start GCN (the reference GCN is Linear + Dropout(p=0); A is unused).
        x = (jnp.dot(x_ref[...], w_start_ref[...], preferred_element_type=f32)
             + bias_row(R_BSTART, dim))
        o_start_ref[...] = x.astype(o_start_ref.dtype)
        org_x = x

        down_outs, scatters = [], []
        for i in range(l_n):
            # down GCN
            x = (jnp.dot(x, w_stack_ref[i], preferred_element_type=f32)
                 + bias_row(R_BDOWN + i, dim))
            down_outs.append(x)
            # GraphPool: rank-based top-k, fully parallel (no serial argmax).
            x, p = _rank_topk_pool(
                x,
                bias_row(R_WP + i, dim),
                bias_ref[R_BP + i:R_BP + i + 1, 0:1],
                keep_sizes[i])
            scatters.append(p)

        # bottom GCN
        x = (jnp.dot(x, w_stack_ref[l_n], preferred_element_type=f32)
             + bias_row(R_BBOT, dim))

        for i in range(l_n):
            up = l_n - 1 - i
            # GraphUnpool: scatter rows back via the one-hot matrix (MXU matmul)
            x = jnp.dot(scatters[up], x, preferred_element_type=f32)
            # up GCN + residual add, fused
            x = (jnp.dot(x, w_stack_ref[l_n + 1 + i],
                         preferred_element_type=f32)
                 + bias_row(R_BUP + i, dim) + down_outs[up])

        # fused concat([x, org_x], 1) @ W_end + b_end via split weight.
        y = (jnp.dot(x, w_end_ref[0:dim, :], preferred_element_type=f32)
             + jnp.dot(org_x, w_end_ref[dim:2 * dim, :],
                       preferred_element_type=f32)
             + bias_row(R_BEND, out_pad))
        o_end_ref[...] = y.astype(o_end_ref.dtype)

    return kernel


# ----------------------------- forward wrapper -------------------------------

def graph_unet_forward(params, A, X, ks):
    n_nodes = A.shape[0]
    in_dim = X.shape[1]
    dim = params["start"][0].shape[1]
    out_dim = params["end"][0].shape[1]
    out_pad = ((out_dim + 127) // 128) * 128     # lane-dense output store
    l_n = len(ks)

    # Static node counts per level (same rounding rule as the PyTorch module).
    level_sizes, keep_sizes = [], []
    cur = n_nodes
    for k in ks:
        level_sizes.append(cur)
        cur = max(1, int(round(k * cur)))
        keep_sizes.append(cur)

    # NOTE: A[idx,:][:,idx] pooling is intentionally skipped — A never feeds any
    # output of this module (the GCNs ignore it); only static node counts matter.

    # ---- pack small parameters into a few lane-dense inputs ----
    bw = max(dim, out_pad)

    def row(vec):
        v = jnp.asarray(vec, jnp.float32).reshape(-1)
        return jnp.zeros((1, bw), jnp.float32).at[0, :v.shape[0]].set(v)

    rows = [row(params["start"][1])]
    rows += [row(params["down"][i][1]) for i in range(l_n)]
    rows += [row(params["pool"][i][0]) for i in range(l_n)]      # (dim,1) -> row
    rows += [row(params["pool"][i][1]) for i in range(l_n)]      # scalar in col 0
    rows += [row(params["bottom"][1])]
    rows += [row(params["up"][i][1]) for i in range(l_n)]
    rows += [row(jnp.pad(params["end"][1], (0, out_pad - out_dim)))]
    bias_pack = jnp.concatenate(rows, axis=0)                    # (4*l_n+3, bw)

    w_stack = jnp.stack(
        [params["down"][i][0] for i in range(l_n)]
        + [params["bottom"][0]]
        + [params["up"][i][0] for i in range(l_n)], axis=0)      # (2*l_n+1, d, d)
    w_end = jnp.pad(params["end"][0], ((0, 0), (0, out_pad - out_dim)))

    kernel = _build_graph_unet_kernel(dim, out_pad, l_n, keep_sizes)

    args = (X.astype(jnp.float32), params["start"][0], w_stack, w_end, bias_pack)

    # Advisory cost estimate for the XLA scheduler.
    flops = 2 * n_nodes * in_dim * dim + 2 * n_nodes * (2 * dim) * out_pad
    trans = 0
    for n_i, k_i in zip(level_sizes, keep_sizes):
        flops += 2 * n_i * dim * dim          # down GCN
        flops += 2 * n_i * n_i * dim          # pool score matrix
        flops += 2 * k_i * n_i * dim          # top-k gather matmul
        flops += 2 * n_i * k_i * dim          # unpool scatter matmul
        flops += 2 * n_i * dim * dim          # up GCN
        trans += n_i * n_i                    # sigmoid of the (n,n) matrix
    flops += 2 * keep_sizes[-1] * dim * dim   # bottom GCN
    bytes_accessed = sum(int(a.size) * 4 for a in args) \
        + 4 * n_nodes * (out_pad + dim)
    cost = pl.CostEstimate(flops=int(flops), transcendentals=int(trans),
                           bytes_accessed=int(bytes_accessed))

    # Single-block, grid-less call: all intermediates stay in VMEM.
    # (For much larger N, tile the row-parallel GCN phases over a "parallel"
    # grid axis — v7x has 2 TensorCores — and re-derive the VMEM ceiling.)
    out_end_pad, out_start = pl.pallas_call(
        kernel,
        out_shape=(jax.ShapeDtypeStruct((n_nodes, out_pad), jnp.float32),
                   jax.ShapeDtypeStruct((n_nodes, dim), jnp.float32)),
        cost_estimate=cost,
    )(*args)
    return out_end_pad[:, :out_dim], out_start


# ----------------------------- pure-JAX reference ----------------------------

def _ref_forward(params, A, X, ks):
    def lin(x, w, b):
        return x @ w + b.reshape(1, -1)

    l_n = len(ks)
    X = lin(X, *params["start"])
    start_outs = X
    org_X = X
    adj_ms, idx_list, down_outs = [], [], []
    for i in range(l_n):
        X = lin(X, *params["down"][i])
        adj_ms.append(A)
        down_outs.append(X)
        w, b = params["pool"][i]
        scores = jax.nn.sigmoid((X @ w + b.reshape(1, 1))[:, 0] / 100.0)
        n_keep = max(1, int(round(ks[i] * A.shape[0])))
        values, idx = jax.lax.top_k(scores, n_keep)
        X = X[idx, :] * values[:, None]
        A = A[idx, :][:, idx]
        idx_list.append(idx)
    X = lin(X, *params["bottom"])
    for i in range(l_n):
        up_idx = l_n - i - 1
        A, idx = adj_ms[up_idx], idx_list[up_idx]
        X = jnp.zeros((A.shape[0], X.shape[1]), X.dtype).at[idx].set(X)
        X = lin(X, *params["up"][i]) + down_outs[up_idx]
    X = jnp.concatenate([X, org_X], axis=1)
    X = lin(X, *params["end"])
    return X, start_outs


# ----------------------------- parameter init --------------------------------

def init_params(key, ks, in_dim, out_dim, dim):
    def linear_init(key, d_in, d_out):
        kw, kb = jax.random.split(key)
        scale = 1.0 / jnp.sqrt(jnp.float32(d_in))
        w = jax.random.uniform(kw, (d_in, d_out), jnp.float32, -scale, scale)
        b = jax.random.uniform(kb, (d_out,), jnp.float32, -scale, scale)
        return w, b

    l_n = len(ks)
    keys = jax.random.split(key, 3 + 3 * l_n)
    return {
        "start": linear_init(keys[0], in_dim, dim),
        "bottom": linear_init(keys[1], dim, dim),
        "end": linear_init(keys[2], 2 * dim, out_dim),
        "down": [linear_init(keys[3 + i], dim, dim) for i in range(l_n)],
        "up": [linear_init(keys[3 + l_n + i], dim, dim) for i in range(l_n)],
        "pool": [linear_init(keys[3 + 2 * l_n + i], dim, 1) for i in range(l_n)],
    }


# ----------------------------------- main -------------------------------------

if __name__ == "__main__":
    # 16 graph nodes, in_dim=8, hidden dim=128 (lane-dense), out_dim=4.
    N, IN_DIM, OUT_DIM, DIM = 16, 8, 4, 128
    KS = [0.5, 0.5]  # two down/up levels: 16 -> 8 -> 4 nodes

    key = jax.random.PRNGKey(0)
    k_p, k_a, k_x = jax.random.split(key, 3)

    params = init_params(k_p, KS, IN_DIM, OUT_DIM, DIM)
    A = (jax.random.uniform(k_a, (N, N), jnp.float32) > 0.5).astype(jnp.float32)
    A = jnp.maximum(A, A.T)                      # symmetric dense adjacency
    X = jax.random.normal(k_x, (N, IN_DIM), jnp.float32)

    out, start_outs = graph_unet_forward(params, A, X, KS)
    out = jax.block_until_ready(out)
    start_outs = jax.block_until_ready(start_outs)

    # sanity check against a pure-JAX reference of the same forward pass
    ref_out, ref_start = _ref_forward(params, A, X, KS)
    assert out.shape == (N, OUT_DIM) and start_outs.shape == (N, DIM)
    assert jnp.allclose(out, ref_out, atol=2e-3, rtol=2e-3)
    assert jnp.allclose(start_outs, ref_start, atol=2e-3, rtol=2e-3)

    print("KERNEL_OK")
</pallas_src>

<mosaic_0001>
module attributes {stable_mosaic.version = 11 : i64} {
  func.func @kernel(%arg0: memref<16x8xf32, #tpu.memory_space<vmem>>, %arg1: memref<8x128xf32, #tpu.memory_space<vmem>>, %arg2: memref<5x128x128xf32, #tpu.memory_space<vmem>>, %arg3: memref<256x128xf32, #tpu.memory_space<vmem>>, %arg4: memref<11x128xf32, #tpu.memory_space<vmem>>, %arg5: memref<16x128xf32, #tpu.memory_space<vmem>>, %arg6: memref<16x128xf32, #tpu.memory_space<vmem>>) attributes {dimension_semantics = [], scalar_prefetch = 0 : i64, scratch_operands = 0 : i64, tpu.core_type = #tpu.core_type<tc>} {
    %c0 = arith.constant 0 : index
    %c0_0 = arith.constant 0 : index
    %0 = vector.load %arg0[%c0, %c0_0] : memref<16x8xf32, #tpu.memory_space<vmem>>, vector<16x8xf32>
    %c0_1 = arith.constant 0 : index
    %c0_2 = arith.constant 0 : index
    %1 = vector.load %arg1[%c0_1, %c0_2] : memref<8x128xf32, #tpu.memory_space<vmem>>, vector<8x128xf32>
    %cst = arith.constant dense<0.000000e+00> : vector<16x128xf32>
    %2 = tpu.matmul %0, %1, %cst {dimension_numbers = #tpu.dot_dimension_numbers<[1], [0], [0], [1], [0, 0, 1, 1], [], []>} : vector<16x8xf32>, vector<8x128xf32>, vector<16x128xf32> -> vector<16x128xf32>
    %c0_3 = arith.constant 0 : index
    %c0_4 = arith.constant 0 : index
    %3 = vector.load %arg4[%c0_3, %c0_4] : memref<11x128xf32, #tpu.memory_space<vmem>>, vector<1x128xf32>
    %4 = vector.broadcast %3 : vector<1x128xf32> to vector<16x128xf32>
    %5 = arith.addf %2, %4 : vector<16x128xf32>
    %c0_5 = arith.constant 0 : index
    %c0_6 = arith.constant 0 : index
    %6 = vector.load %arg6[%c0_5, %c0_6] : memref<16x128xf32, #tpu.memory_space<vmem>>, vector<16x128xf32>
    tpu.vector_store %arg6[%c0_5, %c0_6], %5 {strides = array<i32>} : memref<16x128xf32, #tpu.memory_space<vmem>>, vector<16x128xf32>,
    %c0_7 = arith.constant 0 : index
    %c0_8 = arith.constant 0 : index
    %c0_9 = arith.constant 0 : index
    %7 = vector.load %arg2[%c0_7, %c0_8, %c0_9] : memref<5x128x128xf32, #tpu.memory_space<vmem>>, vector<1x128x128xf32>
    %8 = vector.shape_cast %7 : vector<1x128x128xf32> to vector<128x128xf32>
    %cst_10 = arith.constant dense<0.000000e+00> : vector<16x128xf32>
    %9 = tpu.matmul %5, %8, %cst_10 {dimension_numbers = #tpu.dot_dimension_numbers<[1], [0], [0], [1], [0, 0, 1, 1], [], []>} : vector<16x128xf32>, vector<128x128xf32>, vector<16x128xf32> -> vector<16x128xf32>
    %c1 = arith.constant 1 : index
    %c0_11 = arith.constant 0 : index
    %10 = vector.load %arg4[%c1, %c0_11] : memref<11x128xf32, #tpu.memory_space<vmem>>, vector<1x128xf32>
    %11 = vector.broadcast %10 : vector<1x128xf32> to vector<16x128xf32>
    %12 = arith.addf %9, %11 : vector<16x128xf32>
    %c3 = arith.constant 3 : index
    %c0_12 = arith.constant 0 : index
    %13 = vector.load %arg4[%c3, %c0_12] : memref<11x128xf32, #tpu.memory_space<vmem>>, vector<1x128xf32>
    %c5 = arith.constant 5 : index
    %c0_13 = arith.constant 0 : index
    %14 = vector.load %arg4[%c5, %c0_13] : memref<11x128xf32, #tpu.memory_space<vmem>>, vector<1x1xf32>
    %15 = vector.shape_cast %13 : vector<1x128xf32> to vector<1x128xf32>
    %16 = vector.broadcast %15 : vector<1x128xf32> to vector<16x128xf32>
    %cst_14 = arith.constant dense<0.000000e+00> : vector<16x16xf32>
    %17 = tpu.matmul %16, %12, %cst_14 {dimension_numbers = #tpu.dot_dimension_numbers<[1], [1], [0], [0], [0, 0, 1, 0], [], []>} : vector<16x128xf32>, vector<16x128xf32>, vector<16x16xf32> -> vector<16x16xf32>
    %18 = vector.broadcast %14 : vector<1x1xf32> to vector<16x16xf32>
    %19 = arith.addf %17, %18 : vector<16x16xf32>
    %cst_15 = arith.constant 1.000000e+02 : f32
    %20 = vector.broadcast %cst_15 : f32 to vector<16x16xf32>
    %21 = arith.divf %19, %20 : vector<16x16xf32>
    %22 = arith.negf %21 : vector<16x16xf32>
    %23 = math.exp %22 : vector<16x16xf32>
    %cst_16 = arith.constant 1.000000e+00 : f32
    %24 = vector.broadcast %cst_16 : f32 to vector<16x16xf32>
    %25 = arith.addf %24, %23 : vector<16x16xf32>
    %26 = arith.divf %24, %25 : vector<16x16xf32>
    %27 = tpu.iota {dimensions = array<i32: 0>} : vector<16x16xi32>
    %28 = tpu.iota {dimensions = array<i32: 1>} : vector<16x16xi32>
    %29 = arith.cmpi eq, %27, %28 : vector<16x16xi32>
    %cst_17 = arith.constant 0.000000e+00 : f32
    %30 = vector.broadcast %cst_17 : f32 to vector<16x16xf32>
    %31 = arith.select %29, %26, %30 : vector<16x16xi1>, vector<16x16xf32>
    %cst_18 = arith.constant dense<0.000000e+00> : vector<16xf32>
    %32 = vector.multi_reduction <add>, %31, %cst_18 [1] : vector<16x16xf32> to vector<16xf32>
    %33 = vector.shape_cast %32 : vector<16xf32> to vector<16x1xf32>
    %34 = vector.broadcast %33 : vector<16x1xf32> to vector<16x16xf32>
    %35 = arith.cmpf ogt, %26, %34 : vector<16x16xf32>
    %36 = vector.broadcast %33 : vector<16x1xf32> to vector<16x16xf32>
    %37 = arith.cmpf oeq, %26, %36 : vector<16x16xf32>
    %38 = arith.cmpi slt, %28, %27 : vector<16x16xi32>
    %39 = arith.andi %37, %38 : vector<16x16xi1>
    %40 = arith.ori %35, %39 : vector<16x16xi1>
    %41 = vector.broadcast %33 : vector<16x1xf32> to vector<16x16xf32>
    %42 = arith.cmpf ogt, %41, %26 : vector<16x16xf32>
    %43 = vector.broadcast %33 : vector<16x1xf32> to vector<16x16xf32>
    %44 = arith.cmpf oeq, %43, %26 : vector<16x16xf32>
    %45 = arith.cmpi slt, %27, %28 : vector<16x16xi32>
    %46 = arith.andi %44, %45 : vector<16x16xi1>
    %47 = arith.ori %42, %46 : vector<16x16xi1>
    %48 = arith.extui %40 : vector<16x16xi1> to vector<16x16xi32>
    %49 = arith.sitofp %48 : vector<16x16xi32> to vector<16x16xf32>
    %cst_19 = arith.constant dense<0.000000e+00> : vector<16xf32>
    %50 = vector.multi_reduction <add>, %49, %cst_19 [1] : vector<16x16xf32> to vector<16xf32>
    %51 = vector.shape_cast %50 : vector<16xf32> to vector<16x1xf32>
    %52 = arith.fptosi %51 : vector<16x1xf32> to vector<16x1xi32>
    %53 = arith.extui %47 : vector<16x16xi1> to vector<16x16xi32>
    %54 = arith.sitofp %53 : vector<16x16xi32> to vector<16x16xf32>
    %cst_20 = arith.constant dense<0.000000e+00> : vector<16xf32>
    %55 = vector.multi_reduction <add>, %54, %cst_20 [0] : vector<16x16xf32> to vector<16xf32>
    %56 = vector.shape_cast %55 : vector<16xf32> to vector<1x16xf32>
    %57 = arith.fptosi %56 : vector<1x16xf32> to vector<1x16xi32>
    %58 = vector.shape_cast %57 : vector<1x16xi32> to vector<1x16xi32>
    %59 = vector.broadcast %58 : vector<1x16xi32> to vector<8x16xi32>
    %60 = tpu.iota {dimensions = array<i32: 0>} : vector<8x16xi32>
    %61 = arith.cmpi eq, %59, %60 : vector<8x16xi32>
    %62 = arith.extui %61 : vector<8x16xi1> to vector<8x16xi32>
    %63 = arith.sitofp %62 : vector<8x16xi32> to vector<8x16xf32>
    %64 = tpu.iota {dimensions = array<i32: 1>} : vector<16x8xi32>
    %65 = vector.broadcast %52 : vector<16x1xi32> to vector<16x8xi32>
    %66 = arith.cmpi eq, %65, %64 : vector<16x8xi32>
    %67 = arith.extui %66 : vector<16x8xi1> to vector<16x8xi32>
    %68 = arith.sitofp %67 : vector<16x8xi32> to vector<16x8xf32>
    %69 = vector.broadcast %33 : vector<16x1xf32> to vector<16x128xf32>
    %70 = arith.mulf %12, %69 : vector<16x128xf32>
    %cst_21 = arith.constant dense<0.000000e+00> : vector<8x128xf32>
    %71 = tpu.matmul %63, %70, %cst_21 {dimension_numbers = #tpu.dot_dimension_numbers<[1], [0], [0], [1], [0, 0, 1, 1], [], []>} : vector<8x16xf32>, vector<16x128xf32>, vector<8x128xf32> -> vector<8x128xf32>
    %c1_22 = arith.constant 1 : index
    %c0_23 = arith.constant 0 : index
    %c0_24 = arith.constant 0 : index
    %72 = vector.load %arg2[%c1_22, %c0_23, %c0_24] : memref<5x128x128xf32, #tpu.memory_space<vmem>>, vector<1x128x128xf32>
    %73 = vector.shape_cast %72 : vector<1x128x128xf32> to vector<128x128xf32>
    %cst_25 = arith.constant dense<0.000000e+00> : vector<8x128xf32>
    %74 = tpu.matmul %71, %73, %cst_25 {dimension_numbers = #tpu.dot_dimension_numbers<[1], [0], [0], [1], [0, 0, 1, 1], [], []>} : vector<8x128xf32>, vector<128x128xf32>, vector<8x128xf32> -> vector<8x128xf32>
    %c2 = arith.constant 2 : index
    %c0_26 = arith.constant 0 : index
    %75 = vector.load %arg4[%c2, %c0_26] : memref<11x128xf32, #tpu.memory_space<vmem>>, vector<1x128xf32>
    %76 = vector.broadcast %75 : vector<1x128xf32> to vector<8x128xf32>
    %77 = arith.addf %74, %76 : vector<8x128xf32>
    %c4 = arith.constant 4 : index
    %c0_27 = arith.constant 0 : index
    %78 = vector.load %arg4[%c4, %c0_27] : memref<11x128xf32, #tpu.memory_space<vmem>>, vector<1x128xf32>
    %c6 = arith.constant 6 : index
    %c0_28 = arith.constant 0 : index
    %79 = vector.load %arg4[%c6, %c0_28] : memref<11x128xf32, #tpu.memory_space<vmem>>, vector<1x1xf32>
    %80 = vector.shape_cast %78 : vector<1x128xf32> to vector<1x128xf32>
    %81 = vector.broadcast %80 : vector<1x128xf32> to vector<8x128xf32>
    %cst_29 = arith.constant dense<0.000000e+00> : vector<8x8xf32>
    %82 = tpu.matmul %81, %77, %cst_29 {dimension_numbers = #tpu.dot_dimension_numbers<[1], [1], [0], [0], [0, 0, 1, 0], [], []>} : vector<8x128xf32>, vector<8x128xf32>, vector<8x8xf32> -> vector<8x8xf32>
    %83 = vector.broadcast %79 : vector<1x1xf32> to vector<8x8xf32>
    %84 = arith.addf %82, %83 : vector<8x8xf32>
    %cst_30 = arith.constant 1.000000e+02 : f32
    %85 = vector.broadcast %cst_30 : f32 to vector<8x8xf32>
    %86 = arith.divf %84, %85 : vector<8x8xf32>
    %87 = arith.negf %86 : vector<8x8xf32>
    %88 = math.exp %87 : vector<8x8xf32>
    %cst_31 = arith.constant 1.000000e+00 : f32
    %89 = vector.broadcast %cst_31 : f32 to vector<8x8xf32>
    %90 = arith.addf %89, %88 : vector<8x8xf32>
    %91 = arith.divf %89, %90 : vector<8x8xf32>
    %92 = tpu.iota {dimensions = array<i32: 0>} : vector<8x8xi32>
    %93 = tpu.iota {dimensions = array<i32: 1>} : vector<8x8xi32>
    %94 = arith.cmpi eq, %92, %93 : vector<8x8xi32>
    %cst_32 = arith.constant 0.000000e+00 : f32
    %95 = vector.broadcast %cst_32 : f32 to vector<8x8xf32>
    %96 = arith.select %94, %91, %95 : vector<8x8xi1>, vector<8x8xf32>
    %cst_33 = arith.constant dense<0.000000e+00> : vector<8xf32>
    %97 = vector.multi_reduction <add>, %96, %cst_33 [1] : vector<8x8xf32> to vector<8xf32>
    %98 = vector.shape_cast %97 : vector<8xf32> to vector<8x1xf32>
    %99 = vector.broadcast %98 : vector<8x1xf32> to vector<8x8xf32>
    %100 = arith.cmpf ogt, %91, %99 : vector<8x8xf32>
    %101 = vector.broadcast %98 : vector<8x1xf32> to vector<8x8xf32>
    %102 = arith.cmpf oeq, %91, %101 : vector<8x8xf32>
    %103 = arith.cmpi slt, %93, %92 : vector<8x8xi32>
    %104 = arith.andi %102, %103 : vector<8x8xi1>
    %105 = arith.ori %100, %104 : vector<8x8xi1>
    %106 = vector.broadcast %98 : vector<8x1xf32> to vector<8x8xf32>
    %107 = arith.cmpf ogt, %106, %91 : vector<8x8xf32>
    %108 = vector.broadcast %98 : vector<8x1xf32> to vector<8x8xf32>
    %109 = arith.cmpf oeq, %108, %91 : vector<8x8xf32>
    %110 = arith.cmpi slt, %92, %93 : vector<8x8xi32>
    %111 = arith.andi %109, %110 : vector<8x8xi1>
    %112 = arith.ori %107, %111 : vector<8x8xi1>
    %113 = arith.extui %105 : vector<8x8xi1> to vector<8x8xi32>
    %114 = arith.sitofp %113 : vector<8x8xi32> to vector<8x8xf32>
    %cst_34 = arith.constant dense<0.000000e+00> : vector<8xf32>
    %115 = vector.multi_reduction <add>, %114, %cst_34 [1] : vector<8x8xf32> to vector<8xf32>
    %116 = vector.shape_cast %115 : vector<8xf32> to vector<8x1xf32>
    %117 = arith.fptosi %116 : vector<8x1xf32> to vector<8x1xi32>
    %118 = arith.extui %112 : vector<8x8xi1> to vector<8x8xi32>
    %119 = arith.sitofp %118 : vector<8x8xi32> to vector<8x8xf32>
    %cst_35 = arith.constant dense<0.000000e+00> : vector<8xf32>
    %120 = vector.multi_reduction <add>, %119, %cst_35 [0] : vector<8x8xf32> to vector<8xf32>
    %121 = vector.shape_cast %120 : vector<8xf32> to vector<1x8xf32>
    %122 = arith.fptosi %121 : vector<1x8xf32> to vector<1x8xi32>
    %123 = vector.shape_cast %122 : vector<1x8xi32> to vector<1x8xi32>
    %124 = vector.broadcast %123 : vector<1x8xi32> to vector<4x8xi32>
    %125 = tpu.iota {dimensions = array<i32: 0>} : vector<4x8xi32>
    %126 = arith.cmpi eq, %124, %125 : vector<4x8xi32>
    %127 = arith.extui %126 : vector<4x8xi1> to vector<4x8xi32>
    %128 = arith.sitofp %127 : vector<4x8xi32> to vector<4x8xf32>
    %129 = tpu.iota {dimensions = array<i32: 1>} : vector<8x4xi32>
    %130 = vector.broadcast %117 : vector<8x1xi32> to vector<8x4xi32>
    %131 = arith.cmpi eq, %130, %129 : vector<8x4xi32>
    %132 = arith.extui %131 : vector<8x4xi1> to vector<8x4xi32>
    %133 = arith.sitofp %132 : vector<8x4xi32> to vector<8x4xf32>
    %134 = vector.broadcast %98 : vector<8x1xf32> to vector<8x128xf32>
    %135 = arith.mulf %77, %134 : vector<8x128xf32>
    %cst_36 = arith.constant dense<0.000000e+00> : vector<4x128xf32>
    %136 = tpu.matmul %128, %135, %cst_36 {dimension_numbers = #tpu.dot_dimension_numbers<[1], [0], [0], [1], [0, 0, 1, 1], [], []>} : vector<4x8xf32>, vector<8x128xf32>, vector<4x128xf32> -> vector<4x128xf32>
    %c2_37 = arith.constant 2 : index
    %c0_38 = arith.constant 0 : index
    %c0_39 = arith.constant 0 : index
    %137 = vector.load %arg2[%c2_37, %c0_38, %c0_39] : memref<5x128x128xf32, #tpu.memory_space<vmem>>, vector<1x128x128xf32>
    %138 = vector.shape_cast %137 : vector<1x128x128xf32> to vector<128x128xf32>
    %cst_40 = arith.constant dense<0.000000e+00> : vector<4x128xf32>
    %139 = tpu.matmul %136, %138, %cst_40 {dimension_numbers = #tpu.dot_dimension_numbers<[1], [0], [0], [1], [0, 0, 1, 1], [], []>} : vector<4x128xf32>, vector<128x128xf32>, vector<4x128xf32> -> vector<4x128xf32>
    %c7 = arith.constant 7 : index
    %c0_41 = arith.constant 0 : index
    %140 = vector.load %arg4[%c7, %c0_41] : memref<11x128xf32, #tpu.memory_space<vmem>>, vector<1x128xf32>
    %141 = vector.broadcast %140 : vector<1x128xf32> to vector<4x128xf32>
    %142 = arith.addf %139, %141 : vector<4x128xf32>
    %cst_42 = arith.constant dense<0.000000e+00> : vector<8x128xf32>
    %143 = tpu.matmul %133, %142, %cst_42 {dimension_numbers = #tpu.dot_dimension_numbers<[1], [0], [0], [1], [0, 0, 1, 1], [], []>} : vector<8x4xf32>, vector<4x128xf32>, vector<8x128xf32> -> vector<8x128xf32>
    %c3_43 = arith.constant 3 : index
    %c0_44 = arith.constant 0 : index
    %c0_45 = arith.constant 0 : index
    %144 = vector.load %arg2[%c3_43, %c0_44, %c0_45] : memref<5x128x128xf32, #tpu.memory_space<vmem>>, vector<1x128x128xf32>
    %145 = vector.shape_cast %144 : vector<1x128x128xf32> to vector<128x128xf32>
    %cst_46 = arith.constant dense<0.000000e+00> : vector<8x128xf32>
    %146 = tpu.matmul %143, %145, %cst_46 {dimension_numbers = #tpu.dot_dimension_numbers<[1], [0], [0], [1], [0, 0, 1, 1], [], []>} : vector<8x128xf32>, vector<128x128xf32>, vector<8x128xf32> -> vector<8x128xf32>
    %c8 = arith.constant 8 : index
    %c0_47 = arith.constant 0 : index
    %147 = vector.load %arg4[%c8, %c0_47] : memref<11x128xf32, #tpu.memory_space<vmem>>, vector<1x128xf32>
    %148 = vector.broadcast %147 : vector<1x128xf32> to vector<8x128xf32>
    %149 = arith.addf %146, %148 : vector<8x128xf32>
    %150 = arith.addf %149, %77 : vector<8x128xf32>
    %cst_48 = arith.constant dense<0.000000e+00> : vector<16x128xf32>
    %151 = tpu.matmul %68, %150, %cst_48 {dimension_numbers = #tpu.dot_dimension_numbers<[1], [0], [0], [1], [0, 0, 1, 1], [], []>} : vector<16x8xf32>, vector<8x128xf32>, vector<16x128xf32> -> vector<16x128xf32>
    %c4_49 = arith.constant 4 : index
    %c0_50 = arith.constant 0 : index
    %c0_51 = arith.constant 0 : index
    %152 = vector.load %arg2[%c4_49, %c0_50, %c0_51] : memref<5x128x128xf32, #tpu.memory_space<vmem>>, vector<1x128x128xf32>
    %153 = vector.shape_cast %152 : vector<1x128x128xf32> to vector<128x128xf32>
    %cst_52 = arith.constant dense<0.000000e+00> : vector<16x128xf32>
    %154 = tpu.matmul %151, %153, %cst_52 {dimension_numbers = #tpu.dot_dimension_numbers<[1], [0], [0], [1], [0, 0, 1, 1], [], []>} : vector<16x128xf32>, vector<128x128xf32>, vector<16x128xf32> -> vector<16x128xf32>
    %c9 = arith.constant 9 : index
    %c0_53 = arith.constant 0 : index
    %155 = vector.load %arg4[%c9, %c0_53] : memref<11x128xf32, #tpu.memory_space<vmem>>, vector<1x128xf32>
    %156 = vector.broadcast %155 : vector<1x128xf32> to vector<16x128xf32>
    %157 = arith.addf %154, %156 : vector<16x128xf32>
    %158 = arith.addf %157, %12 : vector<16x128xf32>
    %c0_54 = arith.constant 0 : index
    %c0_55 = arith.constant 0 : index
    %159 = vector.load %arg3[%c0_54, %c0_55] : memref<256x128xf32, #tpu.memory_space<vmem>>, vector<128x128xf32>
    %cst_56 = arith.constant dense<0.000000e+00> : vector<16x128xf32>
    %160 = tpu.matmul %158, %159, %cst_56 {dimension_numbers = #tpu.dot_dimension_numbers<[1], [0], [0], [1], [0, 0, 1, 1], [], []>} : vector<16x128xf32>, vector<128x128xf32>, vector<16x128xf32> -> vector<16x128xf32>
    %c128 = arith.constant 128 : index
    %c0_57 = arith.constant 0 : index
    %161 = vector.load %arg3[%c128, %c0_57] : memref<256x128xf32, #tpu.memory_space<vmem>>, vector<128x128xf32>
    %cst_58 = arith.constant dense<0.000000e+00> : vector<16x128xf32>
    %162 = tpu.matmul %5, %161, %cst_58 {dimension_numbers = #tpu.dot_dimension_numbers<[1], [0], [0], [1], [0, 0, 1, 1], [], []>} : vector<16x128xf32>, vector<128x128xf32>, vector<16x128xf32> -> vector<16x128xf32>
    %163 = arith.addf %160, %162 : vector<16x128xf32>
    %c10 = arith.constant 10 : index
    %c0_59 = arith.constant 0 : index
    %164 = vector.load %arg4[%c10, %c0_59] : memref<11x128xf32, #tpu.memory_space<vmem>>, vector<1x128xf32>
    %165 = vector.broadcast %164 : vector<1x128xf32> to vector<16x128xf32>
    %166 = arith.addf %163, %165 : vector<16x128xf32>
    %c0_60 = arith.constant 0 : index
    %c0_61 = arith.constant 0 : index
    %167 = vector.load %arg5[%c0_60, %c0_61] : memref<16x128xf32, #tpu.memory_space<vmem>>, vector<16x128xf32>
    tpu.vector_store %arg5[%c0_60, %c0_61], %166 {strides = array<i32>} : memref<16x128xf32, #tpu.memory_space<vmem>>, vector<16x128xf32>,
    return
  }
}

</mosaic_0001>

<llo_original>
// kernel: tpu_custom_call.1
$region0: #{tpu_custom_call.1}
  #allocation0 [shape = 'u32[]', space=smem, size = 0x4, offset = 0x4, fixed_abs, tag = 'smem constant byte address 0x4 - core index']
  #allocation1 [shape = 'u32[144,128]{1,0:T(1,128)}', space=vmem, size = 0x12000, scoped, tag = 'internal scratch']
  %s0 = inlined_call_operand.vmem [shape: f32[16,8], index: 0, kind: input, shape index: {}]
  %s1 = inlined_call_operand.vmem [shape: f32[8,128], index: 1, kind: input, shape index: {}]
  %s2 = inlined_call_operand.hbm [shape: f32[5,128,128], index: 2, kind: input, shape index: {}]
  %s3 = inlined_call_operand.hbm [shape: f32[256,128], index: 3, kind: input, shape index: {}]
  %s4 = inlined_call_operand.vmem [shape: f32[11,128], index: 4, kind: input, shape index: {}]
  %s5 = inlined_call_operand.hbm [shape: f32[16,128], index: 5, kind: output, shape index: {0}]
  %s6 = inlined_call_operand.hbm [shape: f32[16,128], index: 6, kind: output, shape index: {1}]
  %7 = xla_tuple %s5, %s6
  %s8 = sld [smem:[#allocation0]]
  $region46: #{tpu_custom_call.1} parent=0
    _
  %s10 = ssub.s32 1, %s8
  %s11 = scalar_select 0, %s10, %s8
  $region1: #{tpu_custom_call.1} parent=0
    #allocation2 [shape = 'u8[327680]{0}', space=vmem, size = 0x50000, scoped, tag = 'input window, operand 2, single buffered']
    #allocation3 [shape = 's32[1]{0}', space=sflag, size = 0x4, scoped, tag = 'scoped memory for tpu_custom_call.1']
    #allocation4 [shape = 's32[1]{0}', space=sflag, size = 0x4, scoped, tag = 'scoped memory for tpu_custom_call.1']
    #allocation5 [shape = 'u8[131072]{0}', space=vmem, size = 0x20000, scoped, tag = 'input window, operand 3, single buffered']
    #allocation6 [shape = 's32[1]{0}', space=sflag, size = 0x4, scoped, tag = 'scoped memory for tpu_custom_call.1']
    #allocation7 [shape = 'u8[8192]{0}', space=vmem, size = 0x2000, scoped, tag = 'output window, operand 0, single buffered']
    #allocation8 [shape = 'u8[8192]{0}', space=vmem, size = 0x2000, scoped, tag = 'output window, operand 1, single buffered']
    #allocation9 [shape = 's32[1]{0}', space=sflag, size = 0x4, scoped, tag = 'scoped memory for tpu_custom_call.1']
    %12 = vsyncpa [#allocation3], 0
    %13 = vsyncpa [#allocation6], 0
    %14 = vsyncpa [#allocation4], 0
    %15 = vsyncpa [#allocation9], 0
    // Predicated region
    $region2: #{tpu_custom_call.1} parent=1 // pred_check
      _
    $region3: #{tpu_custom_call.1} parent=1 // pred_check_branch
      %17 = sbr.rel (0) target = $region5
    $region4: #{tpu_custom_call.1} parent=1 // pred_region
      _
    $region5: #{tpu_custom_call.1} parent=1 // pred_fallthru
      _
    // Predicated region
    $region6: #{tpu_custom_call.1} parent=1 // pred_check
      _
    $region7: #{tpu_custom_call.1} parent=1 // pred_check_branch
      %19 = sbr.rel (0) target = $region9
    $region8: #{tpu_custom_call.1} parent=1 // pred_region
      _
    $region9: #{tpu_custom_call.1} parent=1 // pred_fallthru
      _
    // Predicated region
    $region10: #{tpu_custom_call.1} parent=1 // pred_check
      _
    $region11: #{tpu_custom_call.1} parent=1 // pred_check_branch
      %21 = sbr.rel (0) target = $region13
    $region12: #{tpu_custom_call.1} parent=1 // pred_region
      %s23 = ssub.s32 10240, 10240
      %24 = vsyncadd [#allocation3], %s23
      %s25 = sshll.u32 [#allocation2], 4
      %s26 = int_to_ptr.vmem [resolvable:$true] %s25
      %31 = dma.hbm_to_vmem [thread:$0]  %s2, 10240, %s26, [#allocation3], 128, 128, 8
    $region13: #{tpu_custom_call.1} parent=1 // pred_fallthru
      _
    // Predicated region
    $region14: #{tpu_custom_call.1} parent=1 // pred_check
      _
    $region15: #{tpu_custom_call.1} parent=1 // pred_check_branch
      %33 = sbr.rel (0) target = $region17
    $region16: #{tpu_custom_call.1} parent=1 // pred_region
      %s35 = ssub.s32 4096, 4096
      %36 = vsyncadd [#allocation6], %s35
      %s37 = sshll.u32 [#allocation5], 4
      %s38 = int_to_ptr.vmem [resolvable:$true] %s37
      %43 = dma.hbm_to_vmem [thread:$0]  %s3, 4096, %s38, [#allocation6], 128, 128, 8
    $region17: #{tpu_custom_call.1} parent=1 // pred_fallthru
      _
    // Predicated region
    $region18: #{tpu_custom_call.1} parent=1 // pred_check
      _
    $region19: #{tpu_custom_call.1} parent=1 // pred_check_branch
      %45 = sbr.rel (0) target = $region21
    $region20: #{tpu_custom_call.1} parent=1 // pred_region
      _
    $region21: #{tpu_custom_call.1} parent=1 // pred_fallthru
      _
    // Predicated region
    $region22: #{tpu_custom_call.1} parent=1 // pred_check
      _
    $region23: #{tpu_custom_call.1} parent=1 // pred_check_branch
      %47 = sbr.rel (0) target = $region25
    $region24: #{tpu_custom_call.1} parent=1 // pred_region
      %48 = dma.done [#allocation3], 10240
    $region25: #{tpu_custom_call.1} parent=1 // pred_fallthru
      _
    // Predicated region
    $region26: #{tpu_custom_call.1} parent=1 // pred_check
      _
    $region27: #{tpu_custom_call.1} parent=1 // pred_check_branch
      %50 = sbr.rel (0) target = $region29
    $region28: #{tpu_custom_call.1} parent=1 // pred_region
      %51 = dma.done [#allocation6], 4096
    $region29: #{tpu_custom_call.1} parent=1 // pred_fallthru
      _
    %v52 = vld [vmem:[%s0] sm:$0xff]
    %v53 = vld [vmem:[%s0 + $0x8] sm:$0xff]
    %v54 = vld [vmem:[%s1] sm:$0xff]
    %v55 = vld [vmem:[%s4] sm:$0x1]
    %v56 = vlaneseq
    %v57 = vshrl.u32 %v56, 7
    %v58 = vsub.s32 0, %v57
    %v59 = vrot.slane %v55, %v58
    %vm60 = vcmask 64512
    %v62 = vsel %vm60, %v52, 0
    %v65 = vsel %vm60, %v53, 0
    %67 = vmatprep.subr.mxu0 0.0
    %68 = vmatpush1.msra.mxu0 0.0
    %69 = vmatprep.subr.mxu0 0.0
    %70 = vmatpush1.msra.mxu0 0.0
    %71 = vmatprep.subr.mxu0 0.0
    %72 = vmatpush1.msra.mxu0 0.0
    %73 = vmatprep.subr.mxu0 0.0
    %74 = vmatpush1.msra.mxu0 0.0
    %75 = vmatprep.subr.mxu0 0.0
    %76 = vmatpush1.msra.mxu0 0.0
    %77 = vmatprep.subr.mxu0 0.0
    %78 = vmatpush1.msra.mxu0 0.0
    %79 = vmatprep.subr.mxu0 0.0
    %80 = vmatpush1.msra.mxu0 0.0
    %81 = vmatprep.subr.mxu0 0.0
    %82 = vmatpush1.msra.mxu0 0.0
    %83 = vmatprep.subr.mxu0 0.0
    %84 = vmatpush1.msra.mxu0 0.0
    %85 = vmatprep.subr.mxu0 0.0
    %86 = vmatpush1.msra.mxu0 0.0
    %87 = vmatprep.subr.mxu0 0.0
    %88 = vmatpush1.msra.mxu0 0.0
    %89 = vmatprep.subr.mxu0 0.0
    %90 = vmatpush1.msra.mxu0 0.0
    %91 = vmatprep.subr.mxu0 0.0
    %92 = vmatpush1.msra.mxu0 0.0
    %93 = vmatprep.subr.mxu0 0.0
    %94 = vmatpush1.msra.mxu0 0.0
    %95 = vmatprep.subr.mxu0 0.0
    %96 = vmatpush1.msra.mxu0 0.0
    %97 = vmatprep.subr.mxu0 0.0
    %98 = vmatpush1.msra.mxu0 %v54
    %99 = vmatprep.subr.mxu0 0.0
    %100 = vmatpush2.msra.mxu0 0.0
    %101 = vmatprep.subr.mxu0 0.0
    %102 = vmatpush2.msra.mxu0 0.0
    %103 = vmatprep.subr.mxu0 0.0
    %104 = vmatpush2.msra.mxu0 0.0
    %105 = vmatprep.subr.mxu0 0.0
    %106 = vmatpush2.msra.mxu0 0.0
    %107 = vmatprep.subr.mxu0 0.0
    %108 = vmatpush2.msra.mxu0 0.0
    %109 = vmatprep.subr.mxu0 0.0
    %110 = vmatpush2.msra.mxu0 0.0
    %111 = vmatprep.subr.mxu0 0.0
    %112 = vmatpush2.msra.mxu0 0.0
    %113 = vmatprep.subr.mxu0 0.0
    %114 = vmatpush2.msra.mxu0 0.0
    %115 = vmatprep.subr.mxu0 0.0
    %116 = vmatpush2.msra.mxu0 0.0
    %117 = vmatprep.subr.mxu0 0.0
    %118 = vmatpush2.msra.mxu0 0.0
    %119 = vmatprep.subr.mxu0 0.0
    %120 = vmatpush2.msra.mxu0 0.0
    %121 = vmatprep.subr.mxu0 0.0
    %122 = vmatpush2.msra.mxu0 0.0
    %123 = vmatprep.subr.mxu0 0.0
    %124 = vmatpush2.msra.mxu0 0.0
    %125 = vmatprep.subr.mxu0 0.0
    %126 = vmatpush2.msra.mxu0 0.0
    %127 = vmatprep.subr.mxu0 0.0
    %128 = vmatpush2.msra.mxu0 0.0
    %129 = vmatprep.subr.mxu0 0.0
    %130 = vmatpush2.msra.mxu0 0.0
    %131 = vmatprep.mubr.f32.mxu0 0.0
    %132 = vmatmul.mubr.f32.gmra.mxu0 %v62
    %v133 = vpop.f32.mrf.mxu0
    %v134 = vadd.f32 %v59, %v133
    %v135 = vpop.f32.mrf.mxu0
    %136 = vmatprep.mubr.f32.mxu0 0.0
    %137 = vmatmul.mubr.f32.gmra.mxu0 %v65
    %v138 = vpop.f32.mrf.mxu0
    %v139 = vadd.f32 %v59, %v138
    %v140 = vpop.f32.mrf.mxu0
    %141 = vdwg.mxu0
    %142 = vst [vmem:[#allocation8] sm:$0xff] %v134
    %143 = vst [vmem:[#allocation8 + $0x8] sm:$0xff] %v139
    %v144 = vld [vmem:[#allocation2] sm:$0xff]
    %v145 = vld [vmem:[#allocation2 + $0x8] sm:$0xff]
    %v146 = vld [vmem:[#allocation2 + $0x10] sm:$0xff]
    %v147 = vld [vmem:[#allocation2 + $0x18] sm:$0xff]
    %v148 = vld [vmem:[#allocation2 + $0x20] sm:$0xff]
    %v149 = vld [vmem:[#allocation2 + $0x28] sm:$0xff]
    %v150 = vld [vmem:[#allocation2 + $0x30] sm:$0xff]
    %v151 = vld [vmem:[#allocation2 + $0x38] sm:$0xff]
    %v152 = vld [vmem:[#allocation2 + $0x40] sm:$0xff]
    %v153 = vld [vmem:[#allocation2 + $0x48] sm:$0xff]
    %v154 = vld [vmem:[#allocation2 + $0x50] sm:$0xff]
    %v155 = vld [vmem:[#allocation2 + $0x58] sm:$0xff]
    %v156 = vld [vmem:[#allocation2 + $0x60] sm:$0xff]
    %v157 = vld [vmem:[#allocation2 + $0x68] sm:$0xff]
    %v158 = vld [vmem:[#allocation2 + $0x70] sm:$0xff]
    %v159 = vld [vmem:[#allocation2 + $0x78] sm:$0xff]
    %v160 = vld [vmem:[%s4 + $0x1] sm:$0x1]
    %v161 = vlaneseq
    %v162 = vshrl.u32 %v161, 7
    %v163 = vsub.s32 0, %v162
    %v164 = vrot.slane %v160, %v163
    %165 = vmatprep.subr.mxu0 0.0
    %166 = vmatpush1.msra.mxu0 %v159
    %167 = vmatprep.subr.mxu0 0.0
    %168 = vmatpush1.msra.mxu0 %v158
    %169 = vmatprep.subr.mxu0 0.0
    %170 = vmatpush1.msra.mxu0 %v157
    %171 = vmatprep.subr.mxu0 0.0
    %172 = vmatpush1.msra.mxu0 %v156
    %173 = vmatprep.subr.mxu0 0.0
    %174 = vmatpush1.msra.mxu0 %v155
    %175 = vmatprep.subr.mxu0 0.0
    %176 = vmatpush1.msra.mxu0 %v154
    %177 = vmatprep.subr.mxu0 0.0
    %178 = vmatpush1.msra.mxu0 %v153
    %179 = vmatprep.subr.mxu0 0.0
    %180 = vmatpush1.msra.mxu0 %v152
    %181 = vmatprep.subr.mxu0 0.0
    %182 = vmatpush1.msra.mxu0 %v151
    %183 = vmatprep.subr.mxu0 0.0
    %184 = vmatpush1.msra.mxu0 %v150
    %185 = vmatprep.subr.mxu0 0.0
    %186 = vmatpush1.msra.mxu0 %v149
    %187 = vmatprep.subr.mxu0 0.0
    %188 = vmatpush1.msra.mxu0 %v148
    %189 = vmatprep.subr.mxu0 0.0
    %190 = vmatpush1.msra.mxu0 %v147
    %191 = vmatprep.subr.mxu0 0.0
    %192 = vmatpush1.msra.mxu0 %v146
    %193 = vmatprep.subr.mxu0 0.0
    %194 = vmatpush1.msra.mxu0 %v145
    %195 = vmatprep.subr.mxu0 0.0
    %196 = vmatpush1.msra.mxu0 %v144
    %197 = vmatprep.subr.mxu0 0.0
    %198 = vmatpush2.msra.mxu0 0.0
    %199 = vmatprep.subr.mxu0 0.0
    %200 = vmatpush2.msra.mxu0 0.0
    %201 = vmatprep.subr.mxu0 0.0
    %202 = vmatpush2.msra.mxu0 0.0
    %203 = vmatprep.subr.mxu0 0.0
    %204 = vmatpush2.msra.mxu0 0.0
    %205 = vmatprep.subr.mxu0 0.0
    %206 = vmatpush2.msra.mxu0 0.0
    %207 = vmatprep.subr.mxu0 0.0
    %208 = vmatpush2.msra.mxu0 0.0
    %209 = vmatprep.subr.mxu0 0.0
    %210 = vmatpush2.msra.mxu0 0.0
    %211 = vmatprep.subr.mxu0 0.0
    %212 = vmatpush2.msra.mxu0 0.0
    %213 = vmatprep.subr.mxu0 0.0
    %214 = vmatpush2.msra.mxu0 0.0
    %215 = vmatprep.subr.mxu0 0.0
    %216 = vmatpush2.msra.mxu0 0.0
    %217 = vmatprep.subr.mxu0 0.0
    %218 = vmatpush2.msra.mxu0 0.0
    %219 = vmatprep.subr.mxu0 0.0
    %220 = vmatpush2.msra.mxu0 0.0
    %221 = vmatprep.subr.mxu0 0.0
    %222 = vmatpush2.msra.mxu0 0.0
    %223 = vmatprep.subr.mxu0 0.0
    %224 = vmatpush2.msra.mxu0 0.0
    %225 = vmatprep.subr.mxu0 0.0
    %226 = vmatpush2.msra.mxu0 0.0
    %227 = vmatprep.subr.mxu0 0.0
    %228 = vmatpush2.msra.mxu0 0.0
    %229 = vmatprep.mubr.f32.mxu0 0.0
    %230 = vmatmul.mubr.f32.gmra.mxu0 %v134
    %v231 = vpop.f32.mrf.mxu0
    %v232 = vadd.f32 %v164, %v231
    %v233 = vpop.f32.mrf.mxu0
    %234 = vmatprep.mubr.f32.mxu0 0.0
    %235 = vmatmul.mubr.f32.gmra.mxu0 %v139
    %v236 = vpop.f32.mrf.mxu0
    %v237 = vadd.f32 %v164, %v236
    %v238 = vpop.f32.mrf.mxu0
    %239 = vdwg.mxu0
    %v240 = vld [vmem:[%s4 + $0x3] sm:$0x1]
    %v241 = vld [vmem:[%s4 + $0x5] sm:$0x1]
    %v242 = vlaneseq
    %v243 = vshrl.u32 %v242, 7
    %v244 = vsub.s32 0, %v243
    %v245 = vrot.slane %v240, %v244
    %s247 = vtos %v241
    %v248 = vstv %s247
    %250 = vmatprep.subr.mxu0 0.0
    %251 = vmatpush1.xpose.msra.mxu0 0.0
    %252 = vmatprep.subr.mxu0 0.0
    %253 = vmatpush1.xpose.msra.mxu0 0.0
    %254 = vmatprep.subr.mxu0 0.0
    %255 = vmatpush1.xpose.msra.mxu0 0.0
    %256 = vmatprep.subr.mxu0 0.0
    %257 = vmatpush1.xpose.msra.mxu0 0.0
    %258 = vmatprep.subr.mxu0 0.0
    %259 = vmatpush1.xpose.msra.mxu0 0.0
    %260 = vmatprep.subr.mxu0 0.0
    %261 = vmatpush1.xpose.msra.mxu0 0.0
    %262 = vmatprep.subr.mxu0 0.0
    %263 = vmatpush1.xpose.msra.mxu0 0.0
    %264 = vmatprep.subr.mxu0 0.0
    %265 = vmatpush1.xpose.msra.mxu0 0.0
    %266 = vmatprep.subr.mxu0 0.0
    %267 = vmatpush1.xpose.msra.mxu0 0.0
    %268 = vmatprep.subr.mxu0 0.0
    %269 = vmatpush1.xpose.msra.mxu0 0.0
    %270 = vmatprep.subr.mxu0 0.0
    %271 = vmatpush1.xpose.msra.mxu0 0.0
    %272 = vmatprep.subr.mxu0 0.0
    %273 = vmatpush1.xpose.msra.mxu0 0.0
    %274 = vmatprep.subr.mxu0 0.0
    %275 = vmatpush1.xpose.msra.mxu0 0.0
    %276 = vmatprep.subr.mxu0 0.0
    %277 = vmatpush1.xpose.msra.mxu0 0.0
    %278 = vmatprep.subr.mxu0 0.0
    %279 = vmatpush1.xpose.msra.mxu0 %v237
    %280 = vmatprep.subr.mxu0 0.0
    %281 = vmatpush1.xpose.msra.mxu0 %v232
    %282 = vmatprep.subr.mxu0 0.0
    %283 = vmatpush2.xpose.msra.mxu0 0.0
    %284 = vmatprep.subr.mxu0 0.0
    %285 = vmatpush2.xpose.msra.mxu0 0.0
    %286 = vmatprep.subr.mxu0 0.0
    %287 = vmatpush2.xpose.msra.mxu0 0.0
    %288 = vmatprep.subr.mxu0 0.0
    %289 = vmatpush2.xpose.msra.mxu0 0.0
    %290 = vmatprep.subr.mxu0 0.0
    %291 = vmatpush2.xpose.msra.mxu0 0.0
    %292 = vmatprep.subr.mxu0 0.0
    %293 = vmatpush2.xpose.msra.mxu0 0.0
    %294 = vmatprep.subr.mxu0 0.0
    %295 = vmatpush2.xpose.msra.mxu0 0.0
    %296 = vmatprep.subr.mxu0 0.0
    %297 = vmatpush2.xpose.msra.mxu0 0.0
    %298 = vmatprep.subr.mxu0 0.0
    %299 = vmatpush2.xpose.msra.mxu0 0.0
    %300 = vmatprep.subr.mxu0 0.0
    %301 = vmatpush2.xpose.msra.mxu0 0.0
    %302 = vmatprep.subr.mxu0 0.0
    %303 = vmatpush2.xpose.msra.mxu0 0.0
    %304 = vmatprep.subr.mxu0 0.0
    %305 = vmatpush2.xpose.msra.mxu0 0.0
    %306 = vmatprep.subr.mxu0 0.0
    %307 = vmatpush2.xpose.msra.mxu0 0.0
    %308 = vmatprep.subr.mxu0 0.0
    %309 = vmatpush2.xpose.msra.mxu0 0.0
    %310 = vmatprep.subr.mxu0 0.0
    %311 = vmatpush2.xpose.msra.mxu0 0.0
    %312 = vmatprep.subr.mxu0 0.0
    %313 = vmatpush2.xpose.msra.mxu0 0.0
    %314 = vmatprep.mubr.f32.mxu0 0.0
    %315 = vmatmul.mubr.f32.gmra.mxu0 %v245
    %v316 = vpop.f32.mrf.mxu0
    %v317 = vadd.f32 %v248, %v316
    %v318 = vpop.f32.mrf.mxu0
    %319 = vmatprep.mubr.f32.mxu0 0.0
    %320 = vmatmul.mubr.f32.gmra.mxu0 %v245
    %v321 = vpop.f32.mrf.mxu0
    %v322 = vadd.f32 %v248, %v321
    %v323 = vpop.f32.mrf.mxu0
    %324 = vdwg.mxu0
    %v325 = vrcp.pop 100.0
    %v326 = vmul.f32 %v317, %v325
    %v327 = vmul.f32 %v322, %v325
    %v328 = vxor.u32 %v326, 2147483648
    %v329 = vxor.u32 %v327, 2147483648
    %v330 = vmul.f32 %v328, 1.442695
    %v331 = vpow.pop %v330
    %v332 = vmul.f32 %v329, 1.442695
    %v333 = vpow.pop %v332
    %v334 = vadd.f32 %v331, 1.0
    %v335 = vadd.f32 %v333, 1.0
    %v336 = vrcp.pop %v334
    %v337 = vmul.f32 1.0, %v336
    %v338 = vrcp.pop %v335
    %v339 = vmul.f32 1.0, %v338
    %v340 = vlaneseq
    %v341 = vshrl.u32 %v340, 7
    %v342 = vadd.s32 %v341, 8
    %v343 = vlaneseq
    %v344 = vand.u32 %v343, 127
    %vm345 = vcmp.eq.s32.totalorder %v341, %v344
    %vm346 = vcmp.eq.s32.totalorder %v342, %v344
    %v347 = vsel %vm345, %v337, 0.0
    %v348 = vsel %vm346, %v339, 0.0
    %vm349 = vcmask 130048
    %v350 = vsel %vm349, %v347, 0.0
    %351 = vadd.xlane.f32.xlu0 %v350
    %v352 = vpop.xlane.xlu0 %351
    %v353 = vsel %vm349, %v348, 0.0
    %354 = vadd.xlane.f32.xlu0 %v353
    %v355 = vpop.xlane.xlu0 %354
    %vm356 = vcmp.gt.f32.partialorder %v337, %v352
    %vm357 = vcmp.gt.f32.partialorder %v339, %v355
    %vm358 = vcmp.eq.f32.partialorder %v337, %v352
    %vm359 = vcmp.eq.f32.partialorder %v339, %v355
    %vm360 = vcmp.lt.s32.totalorder %v344, %v341
    %vm361 = vcmp.lt.s32.totalorder %v344, %v342
    %vm362 = vmand %vm358, %vm360
    %vm363 = vmand %vm359, %vm361
    %vm364 = vmor %vm356, %vm362
    %vm365 = vmor %vm357, %vm363
    %vm366 = vcmp.gt.f32.partialorder %v352, %v337
    %vm367 = vcmp.gt.f32.partialorder %v355, %v339
    %vm368 = vcmp.eq.f32.partialorder %v352, %v337
    %vm369 = vcmp.eq.f32.partialorder %v355, %v339
    %vm370 = vcmp.lt.s32.totalorder %v341, %v344
    %vm371 = vcmp.lt.s32.totalorder %v342, %v344
    %vm372 = vmand %vm368, %vm370
    %vm373 = vmand %vm369, %vm371
    %vm374 = vmor %vm366, %vm372
    %vm375 = vmor %vm367, %vm373
    %v376 = vsel %vm364, 1, 0
    %v377 = vsel %vm365, 1, 0
    %v378 = vcvt.s32.f32 %v376
    %v379 = vcvt.s32.f32 %v377
    %v380 = vsel %vm349, %v378, 0.0
    %381 = vadd.xlane.f32.xlu0 %v380
    %v382 = vpop.xlane.xlu0 %381
    %v383 = vsel %vm349, %v379, 0.0
    %384 = vadd.xlane.f32.xlu0 %v383
    %v385 = vpop.xlane.xlu0 %384
    %v386 = vcvt.f32.s32.to.zero.pseudo %v382
    %v387 = vcvt.f32.s32.to.zero.pseudo %v385
    %v388 = vsel %vm374, 1, 0
    %v389 = vsel %vm375, 1, 0
    %v390 = vcvt.s32.f32 %v388
    %v391 = vcvt.s32.f32 %v389
    %v392 = vsel %vm349, %v390, 0.0
    %v393 = vsel %vm349, %v391, 0.0
    %v394 = vadd.f32 %v392, %v393
    %v395 = vrot.slane %v394, 4
    %v396 = vadd.f32 %v394, %v395
    %v397 = vrot.slane %v396, 2
    %v398 = vadd.f32 %v396, %v397
    %v399 = vrot.slane %v398, 1
    %v400 = vadd.f32 %v398, %v399
    %v401 = vcvt.f32.s32.to.zero.pseudo %v400
    %vm402 = vcmp.eq.s32.totalorder %v401, %v341
    %v403 = vsel %vm402, 1, 0
    %v404 = vcvt.s32.f32 %v403
    %vm405 = vcmp.eq.s32.totalorder %v386, %v344
    %vm406 = vcmp.eq.s32.totalorder %v387, %v344
    %v407 = vsel %vm405, 1, 0
    %v408 = vsel %vm406, 1, 0
    %v409 = vcvt.s32.f32 %v407
    %v410 = vcvt.s32.f32 %v408
    %v411 = vmul.f32 %v232, %v352
    %v412 = vmul.f32 %v237, %v355
    %v414 = vsel %vm349, %v404, 0
    %416 = vmatprep.subr.mxu0 0.0
    %417 = vmatpush1.msra.mxu0 0.0
    %418 = vmatprep.subr.mxu0 0.0
    %419 = vmatpush1.msra.mxu0 0.0
    %420 = vmatprep.subr.mxu0 0.0
    %421 = vmatpush1.msra.mxu0 0.0
    %422 = vmatprep.subr.mxu0 0.0
    %423 = vmatpush1.msra.mxu0 0.0
    %424 = vmatprep.subr.mxu0 0.0
    %425 = vmatpush1.msra.mxu0 0.0
    %426 = vmatprep.subr.mxu0 0.0
    %427 = vmatpush1.msra.mxu0 0.0
    %428 = vmatprep.subr.mxu0 0.0
    %429 = vmatpush1.msra.mxu0 0.0
    %430 = vmatprep.subr.mxu0 0.0
    %431 = vmatpush1.msra.mxu0 0.0
    %432 = vmatprep.subr.mxu0 0.0
    %433 = vmatpush1.msra.mxu0 0.0
    %434 = vmatprep.subr.mxu0 0.0
    %435 = vmatpush1.msra.mxu0 0.0
    %436 = vmatprep.subr.mxu0 0.0
    %437 = vmatpush1.msra.mxu0 0.0
    %438 = vmatprep.subr.mxu0 0.0
    %439 = vmatpush1.msra.mxu0 0.0
    %440 = vmatprep.subr.mxu0 0.0
    %441 = vmatpush1.msra.mxu0 0.0
    %442 = vmatprep.subr.mxu0 0.0
    %443 = vmatpush1.msra.mxu0 0.0
    %444 = vmatprep.subr.mxu0 0.0
    %445 = vmatpush1.msra.mxu0 %v412
    %446 = vmatprep.subr.mxu0 0.0
    %447 = vmatpush1.msra.mxu0 %v411
    %448 = vmatprep.subr.mxu0 0.0
    %449 = vmatpush2.msra.mxu0 0.0
    %450 = vmatprep.subr.mxu0 0.0
    %451 = vmatpush2.msra.mxu0 0.0
    %452 = vmatprep.subr.mxu0 0.0
    %453 = vmatpush2.msra.mxu0 0.0
    %454 = vmatprep.subr.mxu0 0.0
    %455 = vmatpush2.msra.mxu0 0.0
    %456 = vmatprep.subr.mxu0 0.0
    %457 = vmatpush2.msra.mxu0 0.0
    %458 = vmatprep.subr.mxu0 0.0
    %459 = vmatpush2.msra.mxu0 0.0
    %460 = vmatprep.subr.mxu0 0.0
    %461 = vmatpush2.msra.mxu0 0.0
    %462 = vmatprep.subr.mxu0 0.0
    %463 = vmatpush2.msra.mxu0 0.0
    %464 = vmatprep.subr.mxu0 0.0
    %465 = vmatpush2.msra.mxu0 0.0
    %466 = vmatprep.subr.mxu0 0.0
    %467 = vmatpush2.msra.mxu0 0.0
    %468 = vmatprep.subr.mxu0 0.0
    %469 = vmatpush2.msra.mxu0 0.0
    %470 = vmatprep.subr.mxu0 0.0
    %471 = vmatpush2.msra.mxu0 0.0
    %472 = vmatprep.subr.mxu0 0.0
    %473 = vmatpush2.msra.mxu0 0.0
    %474 = vmatprep.subr.mxu0 0.0
    %475 = vmatpush2.msra.mxu0 0.0
    %476 = vmatprep.subr.mxu0 0.0
    %477 = vmatpush2.msra.mxu0 0.0
    %478 = vmatprep.subr.mxu0 0.0
    %479 = vmatpush2.msra.mxu0 0.0
    %480 = vmatprep.mubr.f32.mxu0 0.0
    %481 = vmatmul.mubr.f32.gmra.mxu0 %v414
    %v482 = vpop.f32.mrf.mxu0
    %v483 = vadd.f32 0.0, %v482
    %v484 = vpop.f32.mrf.mxu0
    %485 = vdwg.mxu0
    %s486 = scalar_lea.vmem [#allocation2], 128
    %v487 = vld [vmem:[%s486] sm:$0xff]
    %v488 = vld [vmem:[%s486 + $0x8] sm:$0xff]
    %v489 = vld [vmem:[%s486 + $0x10] sm:$0xff]
    %v490 = vld [vmem:[%s486 + $0x18] sm:$0xff]
    %v491 = vld [vmem:[%s486 + $0x20] sm:$0xff]
    %v492 = vld [vmem:[%s486 + $0x28] sm:$0xff]
    %v493 = vld [vmem:[%s486 + $0x30] sm:$0xff]
    %v494 = vld [vmem:[%s486 + $0x38] sm:$0xff]
    %v495 = vld [vmem:[%s486 + $0x40] sm:$0xff]
    %v496 = vld [vmem:[%s486 + $0x48] sm:$0xff]
    %v497 = vld [vmem:[%s486 + $0x50] sm:$0xff]
    %v498 = vld [vmem:[%s486 + $0x58] sm:$0xff]
    %v499 = vld [vmem:[%s486 + $0x60] sm:$0xff]
    %v500 = vld [vmem:[%s486 + $0x68] sm:$0xff]
    %v501 = vld [vmem:[%s486 + $0x70] sm:$0xff]
    %v502 = vld [vmem:[%s486 + $0x78] sm:$0xff]
    %v503 = vld [vmem:[%s4 + $0x2] sm:$0x1]
    %v504 = vlaneseq
    %v505 = vshrl.u32 %v504, 7
    %v506 = vsub.s32 0, %v505
    %v507 = vrot.slane %v503, %v506
    %508 = vmatprep.subr.mxu0 0.0
    %509 = vmatpush1.msra.mxu0 %v502
    %510 = vmatprep.subr.mxu0 0.0
    %511 = vmatpush1.msra.mxu0 %v501
    %512 = vmatprep.subr.mxu0 0.0
    %513 = vmatpush1.msra.mxu0 %v500
    %514 = vmatprep.subr.mxu0 0.0
    %515 = vmatpush1.msra.mxu0 %v499
    %516 = vmatprep.subr.mxu0 0.0
    %517 = vmatpush1.msra.mxu0 %v498
    %518 = vmatprep.subr.mxu0 0.0
    %519 = vmatpush1.msra.mxu0 %v497
    %520 = vmatprep.subr.mxu0 0.0
    %521 = vmatpush1.msra.mxu0 %v496
    %522 = vmatprep.subr.mxu0 0.0
    %523 = vmatpush1.msra.mxu0 %v495
    %524 = vmatprep.subr.mxu0 0.0
    %525 = vmatpush1.msra.mxu0 %v494
    %526 = vmatprep.subr.mxu0 0.0
    %527 = vmatpush1.msra.mxu0 %v493
    %528 = vmatprep.subr.mxu0 0.0
    %529 = vmatpush1.msra.mxu0 %v492
    %530 = vmatprep.subr.mxu0 0.0
    %531 = vmatpush1.msra.mxu0 %v491
    %532 = vmatprep.subr.mxu0 0.0
    %533 = vmatpush1.msra.mxu0 %v490
    %534 = vmatprep.subr.mxu0 0.0
    %535 = vmatpush1.msra.mxu0 %v489
    %536 = vmatprep.subr.mxu0 0.0
    %537 = vmatpush1.msra.mxu0 %v488
    %538 = vmatprep.subr.mxu0 0.0
    %539 = vmatpush1.msra.mxu0 %v487
    %540 = vmatprep.subr.mxu0 0.0
    %541 = vmatpush2.msra.mxu0 0.0
    %542 = vmatprep.subr.mxu0 0.0
    %543 = vmatpush2.msra.mxu0 0.0
    %544 = vmatprep.subr.mxu0 0.0
    %545 = vmatpush2.msra.mxu0 0.0
    %546 = vmatprep.subr.mxu0 0.0
    %547 = vmatpush2.msra.mxu0 0.0
    %548 = vmatprep.subr.mxu0 0.0
    %549 = vmatpush2.msra.mxu0 0.0
    %550 = vmatprep.subr.mxu0 0.0
    %551 = vmatpush2.msra.mxu0 0.0
    %552 = vmatprep.subr.mxu0 0.0
    %553 = vmatpush2.msra.mxu0 0.0
    %554 = vmatprep.subr.mxu0 0.0
    %555 = vmatpush2.msra.mxu0 0.0
    %556 = vmatprep.subr.mxu0 0.0
    %557 = vmatpush2.msra.mxu0 0.0
    %558 = vmatprep.subr.mxu0 0.0
    %559 = vmatpush2.msra.mxu0 0.0
    %560 = vmatprep.subr.mxu0 0.0
    %561 = vmatpush2.msra.mxu0 0.0
    %562 = vmatprep.subr.mxu0 0.0
    %563 = vmatpush2.msra.mxu0 0.0
    %564 = vmatprep.subr.mxu0 0.0
    %565 = vmatpush2.msra.mxu0 0.0
    %566 = vmatprep.subr.mxu0 0.0
    %567 = vmatpush2.msra.mxu0 0.0
    %568 = vmatprep.subr.mxu0 0.0
    %569 = vmatpush2.msra.mxu0 0.0
    %570 = vmatprep.subr.mxu0 0.0
    %571 = vmatpush2.msra.mxu0 0.0
    %572 = vmatprep.mubr.f32.mxu0 0.0
    %573 = vmatmul.mubr.f32.gmra.mxu0 %v483
    %v574 = vpop.f32.mrf.mxu0
    %v575 = vadd.f32 %v507, %v574
    %v576 = vpop.f32.mrf.mxu0
    %577 = vdwg.mxu0
    %v578 = vld [vmem:[%s4 + $0x4] sm:$0x1]
    %v579 = vld [vmem:[%s4 + $0x6] sm:$0x1]
    %v580 = vlaneseq
    %v581 = vshrl.u32 %v580, 7
    %v582 = vsub.s32 0, %v581
    %v583 = vrot.slane %v578, %v582
    %s585 = vtos %v579
    %v586 = vstv %s585
    %588 = vmatprep.subr.mxu0 0.0
    %589 = vmatpush1.xpose.msra.mxu0 0.0
    %590 = vmatprep.subr.mxu0 0.0
    %591 = vmatpush1.xpose.msra.mxu0 0.0
    %592 = vmatprep.subr.mxu0 0.0
    %593 = vmatpush1.xpose.msra.mxu0 0.0
    %594 = vmatprep.subr.mxu0 0.0
    %595 = vmatpush1.xpose.msra.mxu0 0.0
    %596 = vmatprep.subr.mxu0 0.0
    %597 = vmatpush1.xpose.msra.mxu0 0.0
    %598 = vmatprep.subr.mxu0 0.0
    %599 = vmatpush1.xpose.msra.mxu0 0.0
    %600 = vmatprep.subr.mxu0 0.0
    %601 = vmatpush1.xpose.msra.mxu0 0.0
    %602 = vmatprep.subr.mxu0 0.0
    %603 = vmatpush1.xpose.msra.mxu0 0.0
    %604 = vmatprep.subr.mxu0 0.0
    %605 = vmatpush1.xpose.msra.mxu0 0.0
    %606 = vmatprep.subr.mxu0 0.0
    %607 = vmatpush1.xpose.msra.mxu0 0.0
    %608 = vmatprep.subr.mxu0 0.0
    %609 = vmatpush1.xpose.msra.mxu0 0.0
    %610 = vmatprep.subr.mxu0 0.0
    %611 = vmatpush1.xpose.msra.mxu0 0.0
    %612 = vmatprep.subr.mxu0 0.0
    %613 = vmatpush1.xpose.msra.mxu0 0.0
    %614 = vmatprep.subr.mxu0 0.0
    %615 = vmatpush1.xpose.msra.mxu0 0.0
    %616 = vmatprep.subr.mxu0 0.0
    %617 = vmatpush1.xpose.msra.mxu0 0.0
    %618 = vmatprep.subr.mxu0 0.0
    %619 = vmatpush1.xpose.msra.mxu0 %v575
    %620 = vmatprep.subr.mxu0 0.0
    %621 = vmatpush2.xpose.msra.mxu0 0.0
    %622 = vmatprep.subr.mxu0 0.0
    %623 = vmatpush2.xpose.msra.mxu0 0.0
    %624 = vmatprep.subr.mxu0 0.0
    %625 = vmatpush2.xpose.msra.mxu0 0.0
    %626 = vmatprep.subr.mxu0 0.0
    %627 = vmatpush2.xpose.msra.mxu0 0.0
    %628 = vmatprep.subr.mxu0 0.0
    %629 = vmatpush2.xpose.msra.mxu0 0.0
    %630 = vmatprep.subr.mxu0 0.0
    %631 = vmatpush2.xpose.msra.mxu0 0.0
    %632 = vmatprep.subr.mxu0 0.0
    %633 = vmatpush2.xpose.msra.mxu0 0.0
    %634 = vmatprep.subr.mxu0 0.0
    %635 = vmatpush2.xpose.msra.mxu0 0.0
    %636 = vmatprep.subr.mxu0 0.0
    %637 = vmatpush2.xpose.msra.mxu0 0.0
    %638 = vmatprep.subr.mxu0 0.0
    %639 = vmatpush2.xpose.msra.mxu0 0.0
    %640 = vmatprep.subr.mxu0 0.0
    %641 = vmatpush2.xpose.msra.mxu0 0.0
    %642 = vmatprep.subr.mxu0 0.0
    %643 = vmatpush2.xpose.msra.mxu0 0.0
    %644 = vmatprep.subr.mxu0 0.0
    %645 = vmatpush2.xpose.msra.mxu0 0.0
    %646 = vmatprep.subr.mxu0 0.0
    %647 = vmatpush2.xpose.msra.mxu0 0.0
    %648 = vmatprep.subr.mxu0 0.0
    %649 = vmatpush2.xpose.msra.mxu0 0.0
    %650 = vmatprep.subr.mxu0 0.0
    %651 = vmatpush2.xpose.msra.mxu0 0.0
    %652 = vmatprep.mubr.f32.mxu0 0.0
    %653 = vmatmul.mubr.f32.gmra.mxu0 %v583
    %v654 = vpop.f32.mrf.mxu0
    %v655 = vadd.f32 %v586, %v654
    %v656 = vpop.f32.mrf.mxu0
    %657 = vdwg.mxu0
    %v658 = vmul.f32 %v655, %v325
    %v659 = vxor.u32 %v658, 2147483648
    %v660 = vmul.f32 %v659, 1.442695
    %v661 = vpow.pop %v660
    %v662 = vadd.f32 %v661, 1.0
    %v663 = vrcp.pop %v662
    %v664 = vmul.f32 1.0, %v663
    %v665 = vsel %vm345, %v664, 0.0
    %v666 = vsel %vm60, %v665, 0.0
    %667 = vadd.xlane.f32.xlu0 %v666
    %v668 = vpop.xlane.xlu0 %667
    %vm669 = vcmp.gt.f32.partialorder %v664, %v668
    %vm670 = vcmp.eq.f32.partialorder %v664, %v668
    %vm671 = vmand %vm670, %vm360
    %vm672 = vmor %vm669, %vm671
    %vm673 = vcmp.gt.f32.partialorder %v668, %v664
    %vm674 = vcmp.eq.f32.partialorder %v668, %v664
    %vm675 = vmand %vm674, %vm370
    %vm676 = vmor %vm673, %vm675
    %v677 = vsel %vm672, 1, 0
    %v678 = vcvt.s32.f32 %v677
    %v679 = vsel %vm60, %v678, 0.0
    %680 = vadd.xlane.f32.xlu0 %v679
    %v681 = vpop.xlane.xlu0 %680
    %v682 = vcvt.f32.s32.to.zero.pseudo %v681
    %v683 = vsel %vm676, 1, 0
    %v684 = vcvt.s32.f32 %v683
    %v685 = vsel %vm60, %v684, 0.0
    %v686 = vrot.slane %v685, 4
    %v687 = vadd.f32 %v685, %v686
    %v688 = vrot.slane %v687, 2
    %v689 = vadd.f32 %v687, %v688
    %v690 = vrot.slane %v689, 1
    %v691 = vadd.f32 %v689, %v690
    %v692 = vcvt.f32.s32.to.zero.pseudo %v691
    %vm693 = vcmp.eq.s32.totalorder %v692, %v341
    %v694 = vsel %vm693, 1, 0
    %v695 = vcvt.s32.f32 %v694
    %vm696 = vcmp.eq.s32.totalorder %v682, %v344
    %v697 = vsel %vm696, 1, 0
    %v698 = vcvt.s32.f32 %v697
    %v699 = vmul.f32 %v575, %v668
    %v701 = vsel %vm60, %v695, 0
    %703 = vmatprep.subr.mxu0 0.0
    %704 = vmatpush1.msra.mxu0 0.0
    %705 = vmatprep.subr.mxu0 0.0
    %706 = vmatpush1.msra.mxu0 0.0
    %707 = vmatprep.subr.mxu0 0.0
    %708 = vmatpush1.msra.mxu0 0.0
    %709 = vmatprep.subr.mxu0 0.0
    %710 = vmatpush1.msra.mxu0 0.0
    %711 = vmatprep.subr.mxu0 0.0
    %712 = vmatpush1.msra.mxu0 0.0
    %713 = vmatprep.subr.mxu0 0.0
    %714 = vmatpush1.msra.mxu0 0.0
    %715 = vmatprep.subr.mxu0 0.0
    %716 = vmatpush1.msra.mxu0 0.0
    %717 = vmatprep.subr.mxu0 0.0
    %718 = vmatpush1.msra.mxu0 0.0
    %719 = vmatprep.subr.mxu0 0.0
    %720 = vmatpush1.msra.mxu0 0.0
    %721 = vmatprep.subr.mxu0 0.0
    %722 = vmatpush1.msra.mxu0 0.0
    %723 = vmatprep.subr.mxu0 0.0
    %724 = vmatpush1.msra.mxu0 0.0
    %725 = vmatprep.subr.mxu0 0.0
    %726 = vmatpush1.msra.mxu0 0.0
    %727 = vmatprep.subr.mxu0 0.0
    %728 = vmatpush1.msra.mxu0 0.0
    %729 = vmatprep.subr.mxu0 0.0
    %730 = vmatpush1.msra.mxu0 0.0
    %731 = vmatprep.subr.mxu0 0.0
    %732 = vmatpush1.msra.mxu0 0.0
    %733 = vmatprep.subr.mxu0 0.0
    %734 = vmatpush1.msra.mxu0 %v699
    %735 = vmatprep.subr.mxu0 0.0
    %736 = vmatpush2.msra.mxu0 0.0
    %737 = vmatprep.subr.mxu0 0.0
    %738 = vmatpush2.msra.mxu0 0.0
    %739 = vmatprep.subr.mxu0 0.0
    %740 = vmatpush2.msra.mxu0 0.0
    %741 = vmatprep.subr.mxu0 0.0
    %742 = vmatpush2.msra.mxu0 0.0
    %743 = vmatprep.subr.mxu0 0.0
    %744 = vmatpush2.msra.mxu0 0.0
    %745 = vmatprep.subr.mxu0 0.0
    %746 = vmatpush2.msra.mxu0 0.0
    %747 = vmatprep.subr.mxu0 0.0
    %748 = vmatpush2.msra.mxu0 0.0
    %749 = vmatprep.subr.mxu0 0.0
    %750 = vmatpush2.msra.mxu0 0.0
    %751 = vmatprep.subr.mxu0 0.0
    %752 = vmatpush2.msra.mxu0 0.0
    %753 = vmatprep.subr.mxu0 0.0
    %754 = vmatpush2.msra.mxu0 0.0
    %755 = vmatprep.subr.mxu0 0.0
    %756 = vmatpush2.msra.mxu0 0.0
    %757 = vmatprep.subr.mxu0 0.0
    %758 = vmatpush2.msra.mxu0 0.0
    %759 = vmatprep.subr.mxu0 0.0
    %760 = vmatpush2.msra.mxu0 0.0
    %761 = vmatprep.subr.mxu0 0.0
    %762 = vmatpush2.msra.mxu0 0.0
    %763 = vmatprep.subr.mxu0 0.0
    %764 = vmatpush2.msra.mxu0 0.0
    %765 = vmatprep.subr.mxu0 0.0
    %766 = vmatpush2.msra.mxu0 0.0
    %767 = vmatprep.mubr.f32.mxu0 0.0
    %768 = vmatmul.mubr.f32.gmra.mxu0 %v701
    %v769 = vpop.f32.mrf.mxu0
    %v770 = vadd.f32 0.0, %v769
    %v771 = vpop.f32.mrf.mxu0
    %772 = vdwg.mxu0
    %s773 = scalar_lea.vmem [#allocation2], 256
    %v774 = vld [vmem:[%s773] sm:$0xff]
    %v775 = vld [vmem:[%s773 + $0x8] sm:$0xff]
    %v776 = vld [vmem:[%s773 + $0x10] sm:$0xff]
    %v777 = vld [vmem:[%s773 + $0x18] sm:$0xff]
    %v778 = vld [vmem:[%s773 + $0x20] sm:$0xff]
    %v779 = vld [vmem:[%s773 + $0x28] sm:$0xff]
    %v780 = vld [vmem:[%s773 + $0x30] sm:$0xff]
    %v781 = vld [vmem:[%s773 + $0x38] sm:$0xff]
    %v782 = vld [vmem:[%s773 + $0x40] sm:$0xff]
    %v783 = vld [vmem:[%s773 + $0x48] sm:$0xff]
    %v784 = vld [vmem:[%s773 + $0x50] sm:$0xff]
    %v785 = vld [vmem:[%s773 + $0x58] sm:$0xff]
    %v786 = vld [vmem:[%s773 + $0x60] sm:$0xff]
    %v787 = vld [vmem:[%s773 + $0x68] sm:$0xff]
    %v788 = vld [vmem:[%s773 + $0x70] sm:$0xff]
    %v789 = vld [vmem:[%s773 + $0x78] sm:$0xff]
    %v790 = vld [vmem:[%s4 + $0x7] sm:$0x1]
    %v791 = vlaneseq
    %v792 = vshrl.u32 %v791, 7
    %v793 = vsub.s32 0, %v792
    %v794 = vrot.slane %v790, %v793
    %795 = vmatprep.subr.mxu0 0.0
    %796 = vmatpush1.msra.mxu0 %v789
    %797 = vmatprep.subr.mxu0 0.0
    %798 = vmatpush1.msra.mxu0 %v788
    %799 = vmatprep.subr.mxu0 0.0
    %800 = vmatpush1.msra.mxu0 %v787
    %801 = vmatprep.subr.mxu0 0.0
    %802 = vmatpush1.msra.mxu0 %v786
    %803 = vmatprep.subr.mxu0 0.0
    %804 = vmatpush1.msra.mxu0 %v785
    %805 = vmatprep.subr.mxu0 0.0
    %806 = vmatpush1.msra.mxu0 %v784
    %807 = vmatprep.subr.mxu0 0.0
    %808 = vmatpush1.msra.mxu0 %v783
    %809 = vmatprep.subr.mxu0 0.0
    %810 = vmatpush1.msra.mxu0 %v782
    %811 = vmatprep.subr.mxu0 0.0
    %812 = vmatpush1.msra.mxu0 %v781
    %813 = vmatprep.subr.mxu0 0.0
    %814 = vmatpush1.msra.mxu0 %v780
    %815 = vmatprep.subr.mxu0 0.0
    %816 = vmatpush1.msra.mxu0 %v779
    %817 = vmatprep.subr.mxu0 0.0
    %818 = vmatpush1.msra.mxu0 %v778
    %819 = vmatprep.subr.mxu0 0.0
    %820 = vmatpush1.msra.mxu0 %v777
    %821 = vmatprep.subr.mxu0 0.0
    %822 = vmatpush1.msra.mxu0 %v776
    %823 = vmatprep.subr.mxu0 0.0
    %824 = vmatpush1.msra.mxu0 %v775
    %825 = vmatprep.subr.mxu0 0.0
    %826 = vmatpush1.msra.mxu0 %v774
    %827 = vmatprep.subr.mxu0 0.0
    %828 = vmatpush2.msra.mxu0 0.0
    %829 = vmatprep.subr.mxu0 0.0
    %830 = vmatpush2.msra.mxu0 0.0
    %831 = vmatprep.subr.mxu0 0.0
    %832 = vmatpush2.msra.mxu0 0.0
    %833 = vmatprep.subr.mxu0 0.0
    %834 = vmatpush2.msra.mxu0 0.0
    %835 = vmatprep.subr.mxu0 0.0
    %836 = vmatpush2.msra.mxu0 0.0
    %837 = vmatprep.subr.mxu0 0.0
    %838 = vmatpush2.msra.mxu0 0.0
    %839 = vmatprep.subr.mxu0 0.0
    %840 = vmatpush2.msra.mxu0 0.0
    %841 = vmatprep.subr.mxu0 0.0
    %842 = vmatpush2.msra.mxu0 0.0
    %843 = vmatprep.subr.mxu0 0.0
    %844 = vmatpush2.msra.mxu0 0.0
    %845 = vmatprep.subr.mxu0 0.0
    %846 = vmatpush2.msra.mxu0 0.0
    %847 = vmatprep.subr.mxu0 0.0
    %848 = vmatpush2.msra.mxu0 0.0
    %849 = vmatprep.subr.mxu0 0.0
    %850 = vmatpush2.msra.mxu0 0.0
    %851 = vmatprep.subr.mxu0 0.0
    %852 = vmatpush2.msra.mxu0 0.0
    %853 = vmatprep.subr.mxu0 0.0
    %854 = vmatpush2.msra.mxu0 0.0
    %855 = vmatprep.subr.mxu0 0.0
    %856 = vmatpush2.msra.mxu0 0.0
    %857 = vmatprep.subr.mxu0 0.0
    %858 = vmatpush2.msra.mxu0 0.0
    %859 = vmatprep.mubr.f32.mxu0 0.0
    %860 = vmatmul.mubr.f32.gmra.mxu0 %v770
    %v861 = vpop.f32.mrf.mxu0
    %v862 = vadd.f32 %v794, %v861
    %v863 = vpop.f32.mrf.mxu0
    %864 = vdwg.mxu0
    %vm865 = vcmask 31744
    %v867 = vsel %vm865, %v698, 0
    %vm869 = vcmask 1043456
    %v871 = vsel %vm869, %v862, 0
    %873 = vmatprep.subr.mxu0 0.0
    %874 = vmatpush1.msra.mxu0 0.0
    %875 = vmatprep.subr.mxu0 0.0
    %876 = vmatpush1.msra.mxu0 0.0
    %877 = vmatprep.subr.mxu0 0.0
    %878 = vmatpush1.msra.mxu0 0.0
    %879 = vmatprep.subr.mxu0 0.0
    %880 = vmatpush1.msra.mxu0 0.0
    %881 = vmatprep.subr.mxu0 0.0
    %882 = vmatpush1.msra.mxu0 0.0
    %883 = vmatprep.subr.mxu0 0.0
    %884 = vmatpush1.msra.mxu0 0.0
    %885 = vmatprep.subr.mxu0 0.0
    %886 = vmatpush1.msra.mxu0 0.0
    %887 = vmatprep.subr.mxu0 0.0
    %888 = vmatpush1.msra.mxu0 0.0
    %889 = vmatprep.subr.mxu0 0.0
    %890 = vmatpush1.msra.mxu0 0.0
    %891 = vmatprep.subr.mxu0 0.0
    %892 = vmatpush1.msra.mxu0 0.0
    %893 = vmatprep.subr.mxu0 0.0
    %894 = vmatpush1.msra.mxu0 0.0
    %895 = vmatprep.subr.mxu0 0.0
    %896 = vmatpush1.msra.mxu0 0.0
    %897 = vmatprep.subr.mxu0 0.0
    %898 = vmatpush1.msra.mxu0 0.0
    %899 = vmatprep.subr.mxu0 0.0
    %900 = vmatpush1.msra.mxu0 0.0
    %901 = vmatprep.subr.mxu0 0.0
    %902 = vmatpush1.msra.mxu0 0.0
    %903 = vmatprep.subr.mxu0 0.0
    %904 = vmatpush1.msra.mxu0 %v871
    %905 = vmatprep.subr.mxu0 0.0
    %906 = vmatpush2.msra.mxu0 0.0
    %907 = vmatprep.subr.mxu0 0.0
    %908 = vmatpush2.msra.mxu0 0.0
    %909 = vmatprep.subr.mxu0 0.0
    %910 = vmatpush2.msra.mxu0 0.0
    %911 = vmatprep.subr.mxu0 0.0
    %912 = vmatpush2.msra.mxu0 0.0
    %913 = vmatprep.subr.mxu0 0.0
    %914 = vmatpush2.msra.mxu0 0.0
    %915 = vmatprep.subr.mxu0 0.0
    %916 = vmatpush2.msra.mxu0 0.0
    %917 = vmatprep.subr.mxu0 0.0
    %918 = vmatpush2.msra.mxu0 0.0
    %919 = vmatprep.subr.mxu0 0.0
    %920 = vmatpush2.msra.mxu0 0.0
    %921 = vmatprep.subr.mxu0 0.0
    %922 = vmatpush2.msra.mxu0 0.0
    %923 = vmatprep.subr.mxu0 0.0
    %924 = vmatpush2.msra.mxu0 0.0
    %925 = vmatprep.subr.mxu0 0.0
    %926 = vmatpush2.msra.mxu0 0.0
    %927 = vmatprep.subr.mxu0 0.0
    %928 = vmatpush2.msra.mxu0 0.0
    %929 = vmatprep.subr.mxu0 0.0
    %930 = vmatpush2.msra.mxu0 0.0
    %931 = vmatprep.subr.mxu0 0.0
    %932 = vmatpush2.msra.mxu0 0.0
    %933 = vmatprep.subr.mxu0 0.0
    %934 = vmatpush2.msra.mxu0 0.0
    %935 = vmatprep.subr.mxu0 0.0
    %936 = vmatpush2.msra.mxu0 0.0
    %937 = vmatprep.mubr.f32.mxu0 0.0
    %938 = vmatmul.mubr.f32.gmra.mxu0 %v867
    %v939 = vpop.f32.mrf.mxu0
    %v940 = vadd.f32 0.0, %v939
    %v941 = vpop.f32.mrf.mxu0
    %942 = vdwg.mxu0
    %s943 = scalar_lea.vmem [#allocation2], 384
    %v944 = vld [vmem:[%s943] sm:$0xff]
    %v945 = vld [vmem:[%s943 + $0x8] sm:$0xff]
    %v946 = vld [vmem:[%s943 + $0x10] sm:$0xff]
    %v947 = vld [vmem:[%s943 + $0x18] sm:$0xff]
    %v948 = vld [vmem:[%s943 + $0x20] sm:$0xff]
    %v949 = vld [vmem:[%s943 + $0x28] sm:$0xff]
    %v950 = vld [vmem:[%s943 + $0x30] sm:$0xff]
    %v951 = vld [vmem:[%s943 + $0x38] sm:$0xff]
    %v952 = vld [vmem:[%s943 + $0x40] sm:$0xff]
    %v953 = vld [vmem:[%s943 + $0x48] sm:$0xff]
    %v954 = vld [vmem:[%s943 + $0x50] sm:$0xff]
    %v955 = vld [vmem:[%s943 + $0x58] sm:$0xff]
    %v956 = vld [vmem:[%s943 + $0x60] sm:$0xff]
    %v957 = vld [vmem:[%s943 + $0x68] sm:$0xff]
    %v958 = vld [vmem:[%s943 + $0x70] sm:$0xff]
    %v959 = vld [vmem:[%s943 + $0x78] sm:$0xff]
    %v960 = vld [vmem:[%s4 + $0x8] sm:$0x1]
    %v961 = vlaneseq
    %v962 = vshrl.u32 %v961, 7
    %v963 = vsub.s32 0, %v962
    %v964 = vrot.slane %v960, %v963
    %965 = vmatprep.subr.mxu0 0.0
    %966 = vmatpush1.msra.mxu0 %v959
    %967 = vmatprep.subr.mxu0 0.0
    %968 = vmatpush1.msra.mxu0 %v958
    %969 = vmatprep.subr.mxu0 0.0
    %970 = vmatpush1.msra.mxu0 %v957
    %971 = vmatprep.subr.mxu0 0.0
    %972 = vmatpush1.msra.mxu0 %v956
    %973 = vmatprep.subr.mxu0 0.0
    %974 = vmatpush1.msra.mxu0 %v955
    %975 = vmatprep.subr.mxu0 0.0
    %976 = vmatpush1.msra.mxu0 %v954
    %977 = vmatprep.subr.mxu0 0.0
    %978 = vmatpush1.msra.mxu0 %v953
    %979 = vmatprep.subr.mxu0 0.0
    %980 = vmatpush1.msra.mxu0 %v952
    %981 = vmatprep.subr.mxu0 0.0
    %982 = vmatpush1.msra.mxu0 %v951
    %983 = vmatprep.subr.mxu0 0.0
    %984 = vmatpush1.msra.mxu0 %v950
    %985 = vmatprep.subr.mxu0 0.0
    %986 = vmatpush1.msra.mxu0 %v949
    %987 = vmatprep.subr.mxu0 0.0
    %988 = vmatpush1.msra.mxu0 %v948
    %989 = vmatprep.subr.mxu0 0.0
    %990 = vmatpush1.msra.mxu0 %v947
    %991 = vmatprep.subr.mxu0 0.0
    %992 = vmatpush1.msra.mxu0 %v946
    %993 = vmatprep.subr.mxu0 0.0
    %994 = vmatpush1.msra.mxu0 %v945
    %995 = vmatprep.subr.mxu0 0.0
    %996 = vmatpush1.msra.mxu0 %v944
    %997 = vmatprep.subr.mxu0 0.0
    %998 = vmatpush2.msra.mxu0 0.0
    %999 = vmatprep.subr.mxu0 0.0
    %1000 = vmatpush2.msra.mxu0 0.0
    %1001 = vmatprep.subr.mxu0 0.0
    %1002 = vmatpush2.msra.mxu0 0.0
    %1003 = vmatprep.subr.mxu0 0.0
    %1004 = vmatpush2.msra.mxu0 0.0
    %1005 = vmatprep.subr.mxu0 0.0
    %1006 = vmatpush2.msra.mxu0 0.0
    %1007 = vmatprep.subr.mxu0 0.0
    %1008 = vmatpush2.msra.mxu0 0.0
    %1009 = vmatprep.subr.mxu0 0.0
    %1010 = vmatpush2.msra.mxu0 0.0
    %1011 = vmatprep.subr.mxu0 0.0
    %1012 = vmatpush2.msra.mxu0 0.0
    %1013 = vmatprep.subr.mxu0 0.0
    %1014 = vmatpush2.msra.mxu0 0.0
    %1015 = vmatprep.subr.mxu0 0.0
    %1016 = vmatpush2.msra.mxu0 0.0
    %1017 = vmatprep.subr.mxu0 0.0
    %1018 = vmatpush2.msra.mxu0 0.0
    %1019 = vmatprep.subr.mxu0 0.0
    %1020 = vmatpush2.msra.mxu0 0.0
    %1021 = vmatprep.subr.mxu0 0.0
    %1022 = vmatpush2.msra.mxu0 0.0
    %1023 = vmatprep.subr.mxu0 0.0
    %1024 = vmatpush2.msra.mxu0 0.0
    %1025 = vmatprep.subr.mxu0 0.0
    %1026 = vmatpush2.msra.mxu0 0.0
    %1027 = vmatprep.subr.mxu0 0.0
    %1028 = vmatpush2.msra.mxu0 0.0
    %1029 = vmatprep.mubr.f32.mxu0 0.0
    %1030 = vmatmul.mubr.f32.gmra.mxu0 %v940
    %v1031 = vpop.f32.mrf.mxu0
    %v1032 = vadd.f32 %v964, %v1031
    %v1033 = vpop.f32.mrf.mxu0
    %1034 = vdwg.mxu0
    %v1035 = vadd.f32 %v1032, %v575
    %v1037 = vsel %vm60, %v409, 0
    %v1040 = vsel %vm60, %v410, 0
    %1042 = vmatprep.subr.mxu0 0.0
    %1043 = vmatpush1.msra.mxu0 0.0
    %1044 = vmatprep.subr.mxu0 0.0
    %1045 = vmatpush1.msra.mxu0 0.0
    %1046 = vmatprep.subr.mxu0 0.0
    %1047 = vmatpush1.msra.mxu0 0.0
    %1048 = vmatprep.subr.mxu0 0.0
    %1049 = vmatpush1.msra.mxu0 0.0
    %1050 = vmatprep.subr.mxu0 0.0
    %1051 = vmatpush1.msra.mxu0 0.0
    %1052 = vmatprep.subr.mxu0 0.0
    %1053 = vmatpush1.msra.mxu0 0.0
    %1054 = vmatprep.subr.mxu0 0.0
    %1055 = vmatpush1.msra.mxu0 0.0
    %1056 = vmatprep.subr.mxu0 0.0
    %1057 = vmatpush1.msra.mxu0 0.0
    %1058 = vmatprep.subr.mxu0 0.0
    %1059 = vmatpush1.msra.mxu0 0.0
    %1060 = vmatprep.subr.mxu0 0.0
    %1061 = vmatpush1.msra.mxu0 0.0
    %1062 = vmatprep.subr.mxu0 0.0
    %1063 = vmatpush1.msra.mxu0 0.0
    %1064 = vmatprep.subr.mxu0 0.0
    %1065 = vmatpush1.msra.mxu0 0.0
    %1066 = vmatprep.subr.mxu0 0.0
    %1067 = vmatpush1.msra.mxu0 0.0
    %1068 = vmatprep.subr.mxu0 0.0
    %1069 = vmatpush1.msra.mxu0 0.0
    %1070 = vmatprep.subr.mxu0 0.0
    %1071 = vmatpush1.msra.mxu0 0.0
    %1072 = vmatprep.subr.mxu0 0.0
    %1073 = vmatpush1.msra.mxu0 %v1035
    %1074 = vmatprep.subr.mxu0 0.0
    %1075 = vmatpush2.msra.mxu0 0.0
    %1076 = vmatprep.subr.mxu0 0.0
    %1077 = vmatpush2.msra.mxu0 0.0
    %1078 = vmatprep.subr.mxu0 0.0
    %1079 = vmatpush2.msra.mxu0 0.0
    %1080 = vmatprep.subr.mxu0 0.0
    %1081 = vmatpush2.msra.mxu0 0.0
    %1082 = vmatprep.subr.mxu0 0.0
    %1083 = vmatpush2.msra.mxu0 0.0
    %1084 = vmatprep.subr.mxu0 0.0
    %1085 = vmatpush2.msra.mxu0 0.0
    %1086 = vmatprep.subr.mxu0 0.0
    %1087 = vmatpush2.msra.mxu0 0.0
    %1088 = vmatprep.subr.mxu0 0.0
    %1089 = vmatpush2.msra.mxu0 0.0
    %1090 = vmatprep.subr.mxu0 0.0
    %1091 = vmatpush2.msra.mxu0 0.0
    %1092 = vmatprep.subr.mxu0 0.0
    %1093 = vmatpush2.msra.mxu0 0.0
    %1094 = vmatprep.subr.mxu0 0.0
    %1095 = vmatpush2.msra.mxu0 0.0
    %1096 = vmatprep.subr.mxu0 0.0
    %1097 = vmatpush2.msra.mxu0 0.0
    %1098 = vmatprep.subr.mxu0 0.0
    %1099 = vmatpush2.msra.mxu0 0.0
    %1100 = vmatprep.subr.mxu0 0.0
    %1101 = vmatpush2.msra.mxu0 0.0
    %1102 = vmatprep.subr.mxu0 0.0
    %1103 = vmatpush2.msra.mxu0 0.0
    %1104 = vmatprep.subr.mxu0 0.0
    %1105 = vmatpush2.msra.mxu0 0.0
    %1106 = vmatprep.mubr.f32.mxu0 0.0
    %1107 = vmatmul.mubr.f32.gmra.mxu0 %v1037
    %v1108 = vpop.f32.mrf.mxu0
    %v1109 = vadd.f32 0.0, %v1108
    %v1110 = vpop.f32.mrf.mxu0
    %1111 = vmatprep.mubr.f32.mxu0 0.0
    %1112 = vmatmul.mubr.f32.gmra.mxu0 %v1040
    %v1113 = vpop.f32.mrf.mxu0
    %v1114 = vadd.f32 0.0, %v1113
    %v1115 = vpop.f32.mrf.mxu0
    %1116 = vdwg.mxu0
    %s1117 = scalar_lea.vmem [#allocation2], 512
    %v1118 = vld [vmem:[%s1117] sm:$0xff]
    %v1119 = vld [vmem:[%s1117 + $0x8] sm:$0xff]
    %v1120 = vld [vmem:[%s1117 + $0x10] sm:$0xff]
    %v1121 = vld [vmem:[%s1117 + $0x18] sm:$0xff]
    %v1122 = vld [vmem:[%s1117 + $0x20] sm:$0xff]
    %v1123 = vld [vmem:[%s1117 + $0x28] sm:$0xff]
    %v1124 = vld [vmem:[%s1117 + $0x30] sm:$0xff]
    %v1125 = vld [vmem:[%s1117 + $0x38] sm:$0xff]
    %v1126 = vld [vmem:[%s1117 + $0x40] sm:$0xff]
    %v1127 = vld [vmem:[%s1117 + $0x48] sm:$0xff]
    %v1128 = vld [vmem:[%s1117 + $0x50] sm:$0xff]
    %v1129 = vld [vmem:[%s1117 + $0x58] sm:$0xff]
    %v1130 = vld [vmem:[%s1117 + $0x60] sm:$0xff]
    %v1131 = vld [vmem:[%s1117 + $0x68] sm:$0xff]
    %v1132 = vld [vmem:[%s1117 + $0x70] sm:$0xff]
    %v1133 = vld [vmem:[%s1117 + $0x78] sm:$0xff]
    %v1134 = vld [vmem:[%s4 + $0x9] sm:$0x1]
    %v1135 = vlaneseq
    %v1136 = vshrl.u32 %v1135, 7
    %v1137 = vsub.s32 0, %v1136
    %v1138 = vrot.slane %v1134, %v1137
    %1139 = vmatprep.subr.mxu0 0.0
    %1140 = vmatpush1.msra.mxu0 %v1133
    %1141 = vmatprep.subr.mxu0 0.0
    %1142 = vmatpush1.msra.mxu0 %v1132
    %1143 = vmatprep.subr.mxu0 0.0
    %1144 = vmatpush1.msra.mxu0 %v1131
    %1145 = vmatprep.subr.mxu0 0.0
    %1146 = vmatpush1.msra.mxu0 %v1130
    %1147 = vmatprep.subr.mxu0 0.0
    %1148 = vmatpush1.msra.mxu0 %v1129
    %1149 = vmatprep.subr.mxu0 0.0
    %1150 = vmatpush1.msra.mxu0 %v1128
    %1151 = vmatprep.subr.mxu0 0.0
    %1152 = vmatpush1.msra.mxu0 %v1127
    %1153 = vmatprep.subr.mxu0 0.0
    %1154 = vmatpush1.msra.mxu0 %v1126
    %1155 = vmatprep.subr.mxu0 0.0
    %1156 = vmatpush1.msra.mxu0 %v1125
    %1157 = vmatprep.subr.mxu0 0.0
    %1158 = vmatpush1.msra.mxu0 %v1124
    %1159 = vmatprep.subr.mxu0 0.0
    %1160 = vmatpush1.msra.mxu0 %v1123
    %1161 = vmatprep.subr.mxu0 0.0
    %1162 = vmatpush1.msra.mxu0 %v1122
    %1163 = vmatprep.subr.mxu0 0.0
    %1164 = vmatpush1.msra.mxu0 %v1121
    %1165 = vmatprep.subr.mxu0 0.0
    %1166 = vmatpush1.msra.mxu0 %v1120
    %1167 = vmatprep.subr.mxu0 0.0
    %1168 = vmatpush1.msra.mxu0 %v1119
    %1169 = vmatprep.subr.mxu0 0.0
    %1170 = vmatpush1.msra.mxu0 %v1118
    %1171 = vmatprep.subr.mxu0 0.0
    %1172 = vmatpush2.msra.mxu0 0.0
    %1173 = vmatprep.subr.mxu0 0.0
    %1174 = vmatpush2.msra.mxu0 0.0
    %1175 = vmatprep.subr.mxu0 0.0
    %1176 = vmatpush2.msra.mxu0 0.0
    %1177 = vmatprep.subr.mxu0 0.0
    %1178 = vmatpush2.msra.mxu0 0.0
    %1179 = vmatprep.subr.mxu0 0.0
    %1180 = vmatpush2.msra.mxu0 0.0
    %1181 = vmatprep.subr.mxu0 0.0
    %1182 = vmatpush2.msra.mxu0 0.0
    %1183 = vmatprep.subr.mxu0 0.0
    %1184 = vmatpush2.msra.mxu0 0.0
    %1185 = vmatprep.subr.mxu0 0.0
    %1186 = vmatpush2.msra.mxu0 0.0
    %1187 = vmatprep.subr.mxu0 0.0
    %1188 = vmatpush2.msra.mxu0 0.0
    %1189 = vmatprep.subr.mxu0 0.0
    %1190 = vmatpush2.msra.mxu0 0.0
    %1191 = vmatprep.subr.mxu0 0.0
    %1192 = vmatpush2.msra.mxu0 0.0
    %1193 = vmatprep.subr.mxu0 0.0
    %1194 = vmatpush2.msra.mxu0 0.0
    %1195 = vmatprep.subr.mxu0 0.0
    %1196 = vmatpush2.msra.mxu0 0.0
    %1197 = vmatprep.subr.mxu0 0.0
    %1198 = vmatpush2.msra.mxu0 0.0
    %1199 = vmatprep.subr.mxu0 0.0
    %1200 = vmatpush2.msra.mxu0 0.0
    %1201 = vmatprep.subr.mxu0 0.0
    %1202 = vmatpush2.msra.mxu0 0.0
    %1203 = vmatprep.mubr.f32.mxu0 0.0
    %1204 = vmatmul.mubr.f32.gmra.mxu0 %v1109
    %v1205 = vpop.f32.mrf.mxu0
    %v1206 = vadd.f32 %v1138, %v1205
    %v1207 = vpop.f32.mrf.mxu0
    %1208 = vmatprep.mubr.f32.mxu0 0.0
    %1209 = vmatmul.mubr.f32.gmra.mxu0 %v1114
    %v1210 = vpop.f32.mrf.mxu0
    %v1211 = vadd.f32 %v1138, %v1210
    %v1212 = vpop.f32.mrf.mxu0
    %1213 = vdwg.mxu0
    %v1214 = vadd.f32 %v1206, %v232
    %v1215 = vadd.f32 %v1211, %v237
    %v1216 = vld [vmem:[#allocation5] sm:$0xff]
    %v1217 = vld [vmem:[#allocation5 + $0x8] sm:$0xff]
    %v1218 = vld [vmem:[#allocation5 + $0x10] sm:$0xff]
    %v1219 = vld [vmem:[#allocation5 + $0x18] sm:$0xff]
    %v1220 = vld [vmem:[#allocation5 + $0x20] sm:$0xff]
    %v1221 = vld [vmem:[#allocation5 + $0x28] sm:$0xff]
    %v1222 = vld [vmem:[#allocation5 + $0x30] sm:$0xff]
    %v1223 = vld [vmem:[#allocation5 + $0x38] sm:$0xff]
    %v1224 = vld [vmem:[#allocation5 + $0x40] sm:$0xff]
    %v1225 = vld [vmem:[#allocation5 + $0x48] sm:$0xff]
    %v1226 = vld [vmem:[#allocation5 + $0x50] sm:$0xff]
    %v1227 = vld [vmem:[#allocation5 + $0x58] sm:$0xff]
    %v1228 = vld [vmem:[#allocation5 + $0x60] sm:$0xff]
    %v1229 = vld [vmem:[#allocation5 + $0x68] sm:$0xff]
    %v1230 = vld [vmem:[#allocation5 + $0x70] sm:$0xff]
    %v1231 = vld [vmem:[#allocation5 + $0x78] sm:$0xff]
    %v1232 = vld [vmem:[#allocation5 + $0x80] sm:$0xff]
    %v1233 = vld [vmem:[#allocation5 + $0x88] sm:$0xff]
    %v1234 = vld [vmem:[#allocation5 + $0x90] sm:$0xff]
    %v1235 = vld [vmem:[#allocation5 + $0x98] sm:$0xff]
    %v1236 = vld [vmem:[#allocation5 + $0xa0] sm:$0xff]
    %v1237 = vld [vmem:[#allocation5 + $0xa8] sm:$0xff]
    %v1238 = vld [vmem:[#allocation5 + $0xb0] sm:$0xff]
    %v1239 = vld [vmem:[#allocation5 + $0xb8] sm:$0xff]
    %v1240 = vld [vmem:[#allocation5 + $0xc0] sm:$0xff]
    %v1241 = vld [vmem:[#allocation5 + $0xc8] sm:$0xff]
    %v1242 = vld [vmem:[#allocation5 + $0xd0] sm:$0xff]
    %v1243 = vld [vmem:[#allocation5 + $0xd8] sm:$0xff]
    %v1244 = vld [vmem:[#allocation5 + $0xe0] sm:$0xff]
    %v1245 = vld [vmem:[#allocation5 + $0xe8] sm:$0xff]
    %v1246 = vld [vmem:[#allocation5 + $0xf0] sm:$0xff]
    %v1247 = vld [vmem:[#allocation5 + $0xf8] sm:$0xff]
    %1248 = vmatprep.subr.mxu0 0.0
    %1249 = vmatpush1.msra.mxu0 %v1247
    %1250 = vmatprep.subr.mxu0 0.0
    %1251 = vmatpush1.msra.mxu0 %v1246
    %1252 = vmatprep.subr.mxu0 0.0
    %1253 = vmatpush1.msra.mxu0 %v1245
    %1254 = vmatprep.subr.mxu0 0.0
    %1255 = vmatpush1.msra.mxu0 %v1244
    %1256 = vmatprep.subr.mxu0 0.0
    %1257 = vmatpush1.msra.mxu0 %v1243
    %1258 = vmatprep.subr.mxu0 0.0
    %1259 = vmatpush1.msra.mxu0 %v1242
    %1260 = vmatprep.subr.mxu0 0.0
    %1261 = vmatpush1.msra.mxu0 %v1241
    %1262 = vmatprep.subr.mxu0 0.0
    %1263 = vmatpush1.msra.mxu0 %v1240
    %1264 = vmatprep.subr.mxu0 0.0
    %1265 = vmatpush1.msra.mxu0 %v1239
    %1266 = vmatprep.subr.mxu0 0.0
    %1267 = vmatpush1.msra.mxu0 %v1238
    %1268 = vmatprep.subr.mxu0 0.0
    %1269 = vmatpush1.msra.mxu0 %v1237
    %1270 = vmatprep.subr.mxu0 0.0
    %1271 = vmatpush1.msra.mxu0 %v1236
    %1272 = vmatprep.subr.mxu0 0.0
    %1273 = vmatpush1.msra.mxu0 %v1235
    %1274 = vmatprep.subr.mxu0 0.0
    %1275 = vmatpush1.msra.mxu0 %v1234
    %1276 = vmatprep.subr.mxu0 0.0
    %1277 = vmatpush1.msra.mxu0 %v1233
    %1278 = vmatprep.subr.mxu0 0.0
    %1279 = vmatpush1.msra.mxu0 %v1232
    %1280 = vmatprep.subr.mxu0 0.0
    %1281 = vmatpush2.msra.mxu0 0.0
    %1282 = vmatprep.subr.mxu0 0.0
    %1283 = vmatpush2.msra.mxu0 0.0
    %1284 = vmatprep.subr.mxu0 0.0
    %1285 = vmatpush2.msra.mxu0 0.0
    %1286 = vmatprep.subr.mxu0 0.0
    %1287 = vmatpush2.msra.mxu0 0.0
    %1288 = vmatprep.subr.mxu0 0.0
    %1289 = vmatpush2.msra.mxu0 0.0
    %1290 = vmatprep.subr.mxu0 0.0
    %1291 = vmatpush2.msra.mxu0 0.0
    %1292 = vmatprep.subr.mxu0 0.0
    %1293 = vmatpush2.msra.mxu0 0.0
    %1294 = vmatprep.subr.mxu0 0.0
    %1295 = vmatpush2.msra.mxu0 0.0
    %1296 = vmatprep.subr.mxu0 0.0
    %1297 = vmatpush2.msra.mxu0 0.0
    %1298 = vmatprep.subr.mxu0 0.0
    %1299 = vmatpush2.msra.mxu0 0.0
    %1300 = vmatprep.subr.mxu0 0.0
    %1301 = vmatpush2.msra.mxu0 0.0
    %1302 = vmatprep.subr.mxu0 0.0
    %1303 = vmatpush2.msra.mxu0 0.0
    %1304 = vmatprep.subr.mxu0 0.0
    %1305 = vmatpush2.msra.mxu0 0.0
    %1306 = vmatprep.subr.mxu0 0.0
    %1307 = vmatpush2.msra.mxu0 0.0
    %1308 = vmatprep.subr.mxu0 0.0
    %1309 = vmatpush2.msra.mxu0 0.0
    %1310 = vmatprep.subr.mxu0 0.0
    %1311 = vmatpush2.msra.mxu0 0.0
    %1312 = vmatprep.mubr.f32.mxu0 0.0
    %1313 = vmatmul.mubr.f32.gmra.mxu0 %v134
    %v1314 = vpop.f32.mrf.mxu0
    %v1315 = vadd.f32 0.0, %v1314
    %v1316 = vpop.f32.mrf.mxu0
    %1317 = vmatprep.mubr.f32.mxu0 0.0
    %1318 = vmatmul.mubr.f32.gmra.mxu0 %v139
    %v1319 = vpop.f32.mrf.mxu0
    %v1320 = vadd.f32 0.0, %v1319
    %v1321 = vpop.f32.mrf.mxu0
    %1322 = vdwg.mxu0
    %1323 = vmatprep.subr.mxu0 0.0
    %1324 = vmatpush1.msra.mxu0 %v1231
    %1325 = vmatprep.subr.mxu0 0.0
    %1326 = vmatpush1.msra.mxu0 %v1230
    %1327 = vmatprep.subr.mxu0 0.0
    %1328 = vmatpush1.msra.mxu0 %v1229
    %1329 = vmatprep.subr.mxu0 0.0
    %1330 = vmatpush1.msra.mxu0 %v1228
    %1331 = vmatprep.subr.mxu0 0.0
    %1332 = vmatpush1.msra.mxu0 %v1227
    %1333 = vmatprep.subr.mxu0 0.0
    %1334 = vmatpush1.msra.mxu0 %v1226
    %1335 = vmatprep.subr.mxu0 0.0
    %1336 = vmatpush1.msra.mxu0 %v1225
    %1337 = vmatprep.subr.mxu0 0.0
    %1338 = vmatpush1.msra.mxu0 %v1224
    %1339 = vmatprep.subr.mxu0 0.0
    %1340 = vmatpush1.msra.mxu0 %v1223
    %1341 = vmatprep.subr.mxu0 0.0
    %1342 = vmatpush1.msra.mxu0 %v1222
    %1343 = vmatprep.subr.mxu0 0.0
    %1344 = vmatpush1.msra.mxu0 %v1221
    %1345 = vmatprep.subr.mxu0 0.0
    %1346 = vmatpush1.msra.mxu0 %v1220
    %1347 = vmatprep.subr.mxu0 0.0
    %1348 = vmatpush1.msra.mxu0 %v1219
    %1349 = vmatprep.subr.mxu0 0.0
    %1350 = vmatpush1.msra.mxu0 %v1218
    %1351 = vmatprep.subr.mxu0 0.0
    %1352 = vmatpush1.msra.mxu0 %v1217
    %1353 = vmatprep.subr.mxu0 0.0
    %1354 = vmatpush1.msra.mxu0 %v1216
    %1355 = vmatprep.subr.mxu0 0.0
    %1356 = vmatpush2.msra.mxu0 0.0
    %1357 = vmatprep.subr.mxu0 0.0
    %1358 = vmatpush2.msra.mxu0 0.0
    %1359 = vmatprep.subr.mxu0 0.0
    %1360 = vmatpush2.msra.mxu0 0.0
    %1361 = vmatprep.subr.mxu0 0.0
    %1362 = vmatpush2.msra.mxu0 0.0
    %1363 = vmatprep.subr.mxu0 0.0
    %1364 = vmatpush2.msra.mxu0 0.0
    %1365 = vmatprep.subr.mxu0 0.0
    %1366 = vmatpush2.msra.mxu0 0.0
    %1367 = vmatprep.subr.mxu0 0.0
    %1368 = vmatpush2.msra.mxu0 0.0
    %1369 = vmatprep.subr.mxu0 0.0
    %1370 = vmatpush2.msra.mxu0 0.0
    %1371 = vmatprep.subr.mxu0 0.0
    %1372 = vmatpush2.msra.mxu0 0.0
    %1373 = vmatprep.subr.mxu0 0.0
    %1374 = vmatpush2.msra.mxu0 0.0
    %1375 = vmatprep.subr.mxu0 0.0
    %1376 = vmatpush2.msra.mxu0 0.0
    %1377 = vmatprep.subr.mxu0 0.0
    %1378 = vmatpush2.msra.mxu0 0.0
    %1379 = vmatprep.subr.mxu0 0.0
    %1380 = vmatpush2.msra.mxu0 0.0
    %1381 = vmatprep.subr.mxu0 0.0
    %1382 = vmatpush2.msra.mxu0 0.0
    %1383 = vmatprep.subr.mxu0 0.0
    %1384 = vmatpush2.msra.mxu0 0.0
    %1385 = vmatprep.subr.mxu0 0.0
    %1386 = vmatpush2.msra.mxu0 0.0
    %1387 = vmatprep.mubr.f32.mxu0 0.0
    %1388 = vmatmul.mubr.f32.gmra.mxu0 %v1214
    %v1389 = vpop.f32.mrf.mxu0
    %v1390 = vadd.f32 %v1315, %v1389
    %v1391 = vpop.f32.mrf.mxu0
    %1392 = vmatprep.mubr.f32.mxu0 0.0
    %1393 = vmatmul.mubr.f32.gmra.mxu0 %v1215
    %v1394 = vpop.f32.mrf.mxu0
    %v1395 = vadd.f32 %v1320, %v1394
    %v1396 = vpop.f32.mrf.mxu0
    %1397 = vdwg.mxu0
    %v1398 = vld [vmem:[%s4 + $0xa] sm:$0x1]
    %v1399 = vlaneseq
    %v1400 = vshrl.u32 %v1399, 7
    %v1401 = vsub.s32 0, %v1400
    %v1402 = vrot.slane %v1398, %v1401
    %v1403 = vadd.f32 %v1390, %v1402
    %v1404 = vadd.f32 %v1395, %v1402
    %1405 = vst [vmem:[#allocation7] sm:$0xff] %v1403
    %1406 = vst [vmem:[#allocation7 + $0x8] sm:$0xff] %v1404
    // Predicated region
    $region30: #{tpu_custom_call.1} parent=1 // pred_check
      _
    $region31: #{tpu_custom_call.1} parent=1 // pred_check_branch
      %1408 = sbr.rel (0) target = $region33
    $region32: #{tpu_custom_call.1} parent=1 // pred_region
      %s1410 = ssub.s32 256, 256
      %1411 = vsyncadd [#allocation4], %s1410
      %s1412 = sshll.u32 [#allocation7], 4
      %s1413 = int_to_ptr.vmem [resolvable:$true] %s1412
      %1418 = dma.vmem_to_hbm [thread:$0]  %s1413, 256, %s5, [#allocation4], 128, 128, 8
    $region33: #{tpu_custom_call.1} parent=1 // pred_fallthru
      _
    // Predicated region
    $region34: #{tpu_custom_call.1} parent=1 // pred_check
      _
    $region35: #{tpu_custom_call.1} parent=1 // pred_check_branch
      %1420 = sbr.rel (0) target = $region37
    $region36: #{tpu_custom_call.1} parent=1 // pred_region
      %s1422 = ssub.s32 256, 256
      %1423 = vsyncadd [#allocation9], %s1422
      %s1424 = sshll.u32 [#allocation8], 4
      %s1425 = int_to_ptr.vmem [resolvable:$true] %s1424
      %1430 = dma.vmem_to_hbm [thread:$0]  %s1425, 256, %s6, [#allocation9], 128, 128, 8
    $region37: #{tpu_custom_call.1} parent=1 // pred_fallthru
      _
    // Predicated region
    $region38: #{tpu_custom_call.1} parent=1 // pred_check
      _
    $region39: #{tpu_custom_call.1} parent=1 // pred_check_branch
      %1432 = sbr.rel (0) target = $region41
    $region40: #{tpu_custom_call.1} parent=1 // pred_region
      %1433 = dma.done [#allocation4], 256
    $region41: #{tpu_custom_call.1} parent=1 // pred_fallthru
      _
    // Predicated region
    $region42: #{tpu_custom_call.1} parent=1 // pred_check
      _
    $region43: #{tpu_custom_call.1} parent=1 // pred_check_branch
      %1435 = sbr.rel (0) target = $region45
    $region44: #{tpu_custom_call.1} parent=1 // pred_region
      %1436 = dma.done [#allocation9], 256
    $region45: #{tpu_custom_call.1} parent=1 // pred_fallthru
      _
    %1437 = vsyncpa [#allocation3], 1
    %1438 = vsyncpa [#allocation6], 1
    %1439 = vsyncpa [#allocation4], 1
    %1440 = vsyncpa [#allocation9], 1

</llo_original>
